<compile_context>
chip_gen: v5e
topology: v5e:2x2
jax: 0.10.0
libtpu: 0.0.40
codegen_flags: <defaults>
</compile_context>

<pallas_src>
import jax
import jax.numpy as jnp
import numpy as np
from jax import lax
from jax.experimental import pallas as pl
from jax.experimental.pallas import tpu as pltpu


def imgcap_kernel(caps_ref, tf_ref, img_ref, emb_ref,
                  wenc_ref, benc_ref,            # fused encoder (F, 2H), (1, 2H)
                  wih_ref, whh_ref, bg_ref,      # LSTM gates (E, 4H), (H, 4H), (1, 4H)
                  wout_ref, bout_ref,            # vocab projection (H, V), (1, V)
                  out_ref,                       # (1, B, V) block for timestep t
                  h_sc, c_sc, x_sc, idx_sc):     # VMEM carries across grid steps
    t = pl.program_id(0)
    S = pl.num_programs(0)
    _, B, V = out_ref.shape
    H = wout_ref.shape[0]
    bf = jnp.bfloat16

    @pl.when(t == 0)
    def _init():
        # outputs[0] stays zero (matches torch.zeros init)
        out_ref[0] = jnp.zeros((B, V), jnp.float32)
        # encoder: one fused (F, 2H) matmul, split into h0 / c0
        enc = jnp.tanh(
            jnp.dot(img_ref[...].astype(bf), wenc_ref[...],
                    preferred_element_type=jnp.float32) + benc_ref[...])
        h_sc[...] = enc[:, :H]
        c_sc[...] = enc[:, H:]
        # initial decoder input index = captions[0]
        idx_sc[...] = caps_ref[0]

    @pl.when(t > 0)
    def _step():
        # ---- embedding gather: B dynamic row reads (replaces one-hot @ emb) ----
        for b in range(B):
            tok = idx_sc[b, 0]                                   # i32 scalar
            x_sc[pl.ds(b, 1), :] = emb_ref[pl.ds(tok, 1), :]     # one (1, E) row

        x = x_sc[...].astype(bf)       # (B, E) bf16
        h = h_sc[...]                  # (B, H) f32

        # ---- LSTM gates: two MXU pushes, no f32 concat ----
        gates = (jnp.dot(x, wih_ref[...], preferred_element_type=jnp.float32)
                 + jnp.dot(h.astype(bf), whh_ref[...],
                           preferred_element_type=jnp.float32)
                 + bg_ref[...])
        i_g = jax.nn.sigmoid(gates[:, 0 * H:1 * H])
        f_g = jax.nn.sigmoid(gates[:, 1 * H:2 * H])
        g_g = jnp.tanh(gates[:, 2 * H:3 * H])
        o_g = jax.nn.sigmoid(gates[:, 3 * H:4 * H])
        c_new = f_g * c_sc[...] + i_g * g_g
        h_new = o_g * jnp.tanh(c_new)
        h_sc[...] = h_new
        c_sc[...] = c_new

        # ---- vocab projection; lane-dense store into this step's output block ----
        logits = (jnp.dot(h_new.astype(bf), wout_ref[...],
                          preferred_element_type=jnp.float32) + bout_ref[...])
        out_ref[0] = logits

        # ---- next decoder input (skipped entirely on the last step) ----
        not_last = t < (S - 1)
        tf_on = tf_ref[t] > 0

        @pl.when(jnp.logical_and(not_last, tf_on))
        def _teacher_forced():
            # input = captions[t]; no argmax / reductions on this path
            idx_sc[...] = caps_ref[t]

        @pl.when(jnp.logical_and(not_last, jnp.logical_not(tf_on)))
        def _greedy():
            # top1 = argmax(logits, axis=1), first-max tie-breaking (f32 exact)
            lane_iota = lax.broadcasted_iota(jnp.int32, (B, V), 1)
            mx = jnp.max(logits, axis=1, keepdims=True)
            top1 = jnp.min(jnp.where(logits == mx, lane_iota, V),
                           axis=1, keepdims=True)                # (B, 1) int32
            idx_sc[...] = top1


def pack_params(p):
    """Host-side packing: fuse encoder weights; bf16 matmul weights.

    emb keeps f32 storage (bf16-rounded values) so the in-kernel dynamic
    single-row gather never slices packed bf16 sublanes; matmul weights are
    bf16 (f32 MXU accumulation via preferred_element_type)."""
    bf = jnp.bfloat16
    return {
        "emb":     p["emb"].astype(bf).astype(jnp.float32),
        "W_enc":   jnp.concatenate([p["W_enc_h"], p["W_enc_c"]], axis=1).astype(bf),
        "b_enc":   jnp.concatenate([p["b_enc_h"], p["b_enc_c"]], axis=1),
        "W_ih":    p["W_ih"].astype(bf),
        "W_hh":    p["W_hh"].astype(bf),
        "b_gates": p["b_gates"],
        "W_out":   p["W_out"].astype(bf),
        "b_out":   p["b_out"],
    }


def imgcap_forward(image_vectors, captions, tf_mask, kparams):
    B, F = image_vectors.shape
    S = captions.shape[0]
    V, E = kparams["emb"].shape
    H = kparams["W_out"].shape[0]

    # (S, B, 1) layout so caps_ref[t] is a (B, 1) sublane column (no transposes)
    caps3d = captions.astype(jnp.int32).reshape(S, B, 1)

    vmem = pl.BlockSpec(memory_space=pltpu.MemorySpace.VMEM)
    smem = pl.BlockSpec(memory_space=pltpu.MemorySpace.SMEM)

    return pl.pallas_call(
        imgcap_kernel,
        out_shape=jax.ShapeDtypeStruct((S, B, V), jnp.float32),
        grid=(S,),
        in_specs=[vmem,   # captions (S, B, 1) int32, resident
                  smem,   # tf_mask (S,) int32
                  vmem,   # image_vectors (B, F) f32
                  vmem,   # emb (V, E) f32 (bf16-rounded values)
                  vmem,   # W_enc (F, 2H) bf16
                  vmem,   # b_enc (1, 2H) f32
                  vmem,   # W_ih (E, 4H) bf16
                  vmem,   # W_hh (H, 4H) bf16
                  vmem,   # b_gates (1, 4H) f32
                  vmem,   # W_out (H, V) bf16
                  vmem],  # b_out (1, V) f32
        # One timestep's logits per grid step: writeback DMA of step t-1
        # overlaps step t's compute; resident output VMEM is one (B, V) tile.
        out_specs=pl.BlockSpec((1, B, V), lambda t: (t, 0, 0)),
        scratch_shapes=[
            pltpu.VMEM((B, H), jnp.float32),   # h carry
            pltpu.VMEM((B, H), jnp.float32),   # c carry
            pltpu.VMEM((B, E), jnp.float32),   # gathered embedding rows
            pltpu.VMEM((B, 1), jnp.int32),     # next-token indices
        ],
        compiler_params=pltpu.CompilerParams(
            # the timestep recurrence is sequential (scratch carry)
            dimension_semantics=("arbitrary",),
            # generation-aware ceiling: well under v5e/v6e 128 MiB physical,
            # leaves double-buffer headroom under v7x's 64 MiB physical VMEM
            vmem_limit_bytes=48 * 1024 * 1024),
    )(caps3d, tf_mask.astype(jnp.int32), image_vectors,
      kparams["emb"], kparams["W_enc"], kparams["b_enc"],
      kparams["W_ih"], kparams["W_hh"], kparams["b_gates"],
      kparams["W_out"], kparams["b_out"])


def imgcap_reference(image_vectors, captions, tf_mask, params):
    """Pure-JAX reference mirroring the PyTorch forward() with the same
    precision policy as the kernel (bf16 weight storage, f32 accumulation)."""
    bf = jnp.bfloat16
    B = image_vectors.shape[0]
    S = captions.shape[0]
    V = params["emb"].shape[0]
    H = params["W_hh"].shape[0]

    def mm(a, w):
        return jnp.dot(a.astype(bf), w.astype(bf), preferred_element_type=jnp.float32)

    emb = params["emb"].astype(bf)
    h = jnp.tanh(mm(image_vectors, params["W_enc_h"]) + params["b_enc_h"])
    c = jnp.tanh(mm(image_vectors, params["W_enc_c"]) + params["b_enc_c"])
    outputs = jnp.zeros((S, B, V), jnp.float32)
    inp = captions[0]
    for t in range(1, S):
        x = emb[inp].astype(jnp.float32)
        gates = mm(x, params["W_ih"]) + mm(h, params["W_hh"]) + params["b_gates"]
        i_g = jax.nn.sigmoid(gates[:, 0 * H:1 * H])
        f_g = jax.nn.sigmoid(gates[:, 1 * H:2 * H])
        g_g = jnp.tanh(gates[:, 2 * H:3 * H])
        o_g = jax.nn.sigmoid(gates[:, 3 * H:4 * H])
        c = f_g * c + i_g * g_g
        h = o_g * jnp.tanh(c)
        logits = mm(h, params["W_out"]) + params["b_out"]
        outputs = outputs.at[t].set(logits)
        top1 = jnp.argmax(logits, axis=1).astype(captions.dtype)
        inp = jnp.where(tf_mask[t] > 0, captions[t], top1)
    return outputs


if __name__ == "__main__":
    # small, TPU-tile-friendly shapes (lane dims multiples of 128, B multiple of 16)
    B, F, S, V, E, H = 16, 128, 8, 128, 128, 128

    key = jax.random.PRNGKey(0)
    keys = jax.random.split(key, 16)

    def nrm(k, shape, scale=0.1):
        return (scale * jax.random.normal(k, shape)).astype(jnp.float32)

    params = {
        "emb":     nrm(keys[0], (V, E)),
        "W_enc_h": nrm(keys[1], (F, H)),
        "b_enc_h": nrm(keys[2], (1, H)),
        "W_enc_c": nrm(keys[3], (F, H)),
        "b_enc_c": nrm(keys[4], (1, H)),
        "W_ih":    nrm(keys[5], (E, 4 * H)),
        "W_hh":    nrm(keys[6], (H, 4 * H)),
        "b_gates": nrm(keys[7], (1, 4 * H)),
        "W_out":   nrm(keys[8], (H, V)),
        "b_out":   nrm(keys[9], (1, V)),
    }

    image_vectors = nrm(keys[10], (B, F), scale=1.0)
    captions = jax.random.randint(keys[11], (S, B), 0, V, dtype=jnp.int32)
    # deterministic stand-in for `random.random() < teacher_forcing_ratio`
    tf_mask = jax.random.bernoulli(keys[12], 0.5, (S,)).astype(jnp.int32)

    kparams = pack_params(params)
    out = imgcap_forward(image_vectors, captions, tf_mask, kparams)
    out = jax.block_until_ready(out)

    ref = imgcap_reference(image_vectors, captions, tf_mask, params)
    np.testing.assert_allclose(np.asarray(out), np.asarray(ref),
                               rtol=1e-2, atol=1e-2)
    assert np.all(np.asarray(out[0]) == 0.0)  # outputs[0] stays zero, as in torch

    print("KERNEL_OK")
</pallas_src>

<mosaic_0001>
module attributes {stable_mosaic.version = 11 : i64} {
  func.func @imgcap_kernel(%arg0: i32, %arg1: memref<8x16x1xi32, #tpu.memory_space<vmem>>, %arg2: memref<8xi32, #tpu.memory_space<smem>>, %arg3: memref<16x128xf32, #tpu.memory_space<vmem>>, %arg4: memref<128x128xf32, #tpu.memory_space<vmem>>, %arg5: memref<128x256xbf16, #tpu.memory_space<vmem>>, %arg6: memref<1x256xf32, #tpu.memory_space<vmem>>, %arg7: memref<128x512xbf16, #tpu.memory_space<vmem>>, %arg8: memref<128x512xbf16, #tpu.memory_space<vmem>>, %arg9: memref<1x512xf32, #tpu.memory_space<vmem>>, %arg10: memref<128x128xbf16, #tpu.memory_space<vmem>>, %arg11: memref<1x128xf32, #tpu.memory_space<vmem>>, %arg12: memref<1x16x128xf32, #tpu.memory_space<vmem>>, %arg13: memref<16x128xf32, #tpu.memory_space<vmem>>, %arg14: memref<16x128xf32, #tpu.memory_space<vmem>>, %arg15: memref<16x128xf32, #tpu.memory_space<vmem>>, %arg16: memref<16x1xi32, #tpu.memory_space<vmem>>) attributes {dimension_semantics = [#tpu.dimension_semantics<arbitrary>], iteration_bounds = array<i64: 8>, scalar_prefetch = 0 : i64, scratch_operands = 4 : i64, tpu.core_type = #tpu.core_type<tc>, window_params = [{pipeline_mode = #tpu.pipeline_mode<synchronous>, transform_indices = @transform_0, window_bounds = array<i64: 8, 16, 1>}, {transform_indices = @transform_1, window_bounds = array<i64: 8>}, {pipeline_mode = #tpu.pipeline_mode<synchronous>, transform_indices = @transform_2, window_bounds = array<i64: 16, 128>}, {pipeline_mode = #tpu.pipeline_mode<synchronous>, transform_indices = @transform_3, window_bounds = array<i64: 128, 128>}, {pipeline_mode = #tpu.pipeline_mode<synchronous>, transform_indices = @transform_4, window_bounds = array<i64: 128, 256>}, {pipeline_mode = #tpu.pipeline_mode<synchronous>, transform_indices = @transform_5, window_bounds = array<i64: 1, 256>}, {pipeline_mode = #tpu.pipeline_mode<synchronous>, transform_indices = @transform_6, window_bounds = array<i64: 128, 512>}, {pipeline_mode = #tpu.pipeline_mode<synchronous>, transform_indices = @transform_7, window_bounds = array<i64: 128, 512>}, {pipeline_mode = #tpu.pipeline_mode<synchronous>, transform_indices = @transform_8, window_bounds = array<i64: 1, 512>}, {pipeline_mode = #tpu.pipeline_mode<synchronous>, transform_indices = @transform_9, window_bounds = array<i64: 128, 128>}, {pipeline_mode = #tpu.pipeline_mode<synchronous>, transform_indices = @transform_10, window_bounds = array<i64: 1, 128>}, {transform_indices = @transform_11, window_bounds = array<i64: 1, 16, 128>}]} {
    %c0_i32 = arith.constant 0 : i32
    %0 = arith.cmpi eq, %arg0, %c0_i32 : i32
    %1 = arith.extui %0 : i1 to i32
    %c0_i32_0 = arith.constant 0 : i32
    %2 = arith.cmpi ne, %1, %c0_i32_0 : i32
    scf.if %2 {
      %cst = arith.constant 0.000000e+00 : f32
      %6 = vector.broadcast %cst : f32 to vector<16x128xf32>
      %c0 = arith.constant 0 : index
      %c0_3 = arith.constant 0 : index
      %c0_4 = arith.constant 0 : index
      %7 = vector.load %arg12[%c0, %c0_3, %c0_4] : memref<1x16x128xf32, #tpu.memory_space<vmem>>, vector<1x16x128xf32>
      %8 = vector.shape_cast %7 : vector<1x16x128xf32> to vector<16x128xf32>
      %9 = vector.shape_cast %6 : vector<16x128xf32> to vector<1x16x128xf32>
      tpu.vector_store %arg12[%c0, %c0_3, %c0_4], %9 {strides = array<i32>} : memref<1x16x128xf32, #tpu.memory_space<vmem>>, vector<1x16x128xf32>,
      %c0_5 = arith.constant 0 : index
      %c0_6 = arith.constant 0 : index
      %10 = vector.load %arg3[%c0_5, %c0_6] : memref<16x128xf32, #tpu.memory_space<vmem>>, vector<16x128xf32>
      %11 = arith.truncf %10 : vector<16x128xf32> to vector<16x128xbf16>
      %c0_7 = arith.constant 0 : index
      %c0_8 = arith.constant 0 : index
      %12 = vector.load %arg5[%c0_7, %c0_8] : memref<128x256xbf16, #tpu.memory_space<vmem>>, vector<128x256xbf16>
      %cst_9 = arith.constant dense<0.000000e+00> : vector<16x256xf32>
      %13 = tpu.matmul %11, %12, %cst_9 {dimension_numbers = #tpu.dot_dimension_numbers<[1], [0], [0], [1], [0, 0, 1, 1], [], []>} : vector<16x128xbf16>, vector<128x256xbf16>, vector<16x256xf32> -> vector<16x256xf32>
      %c0_10 = arith.constant 0 : index
      %c0_11 = arith.constant 0 : index
      %14 = vector.load %arg6[%c0_10, %c0_11] : memref<1x256xf32, #tpu.memory_space<vmem>>, vector<1x256xf32>
      %15 = vector.broadcast %14 : vector<1x256xf32> to vector<16x256xf32>
      %16 = arith.addf %13, %15 : vector<16x256xf32>
      %17 = math.tanh %16 : vector<16x256xf32>
      %18 = vector.extract_strided_slice %17 {offsets = [0, 0], sizes = [16, 128], strides = [1, 1]} : vector<16x256xf32> to vector<16x128xf32>
      %c0_12 = arith.constant 0 : index
      %c0_13 = arith.constant 0 : index
      %19 = vector.load %arg13[%c0_12, %c0_13] : memref<16x128xf32, #tpu.memory_space<vmem>>, vector<16x128xf32>
      tpu.vector_store %arg13[%c0_12, %c0_13], %18 {strides = array<i32>} : memref<16x128xf32, #tpu.memory_space<vmem>>, vector<16x128xf32>,
      %20 = vector.extract_strided_slice %17 {offsets = [0, 128], sizes = [16, 128], strides = [1, 1]} : vector<16x256xf32> to vector<16x128xf32>
      %c0_14 = arith.constant 0 : index
      %c0_15 = arith.constant 0 : index
      %21 = vector.load %arg14[%c0_14, %c0_15] : memref<16x128xf32, #tpu.memory_space<vmem>>, vector<16x128xf32>
      tpu.vector_store %arg14[%c0_14, %c0_15], %20 {strides = array<i32>} : memref<16x128xf32, #tpu.memory_space<vmem>>, vector<16x128xf32>,
      %c0_16 = arith.constant 0 : index
      %c0_17 = arith.constant 0 : index
      %c0_18 = arith.constant 0 : index
      %22 = vector.load %arg1[%c0_16, %c0_17, %c0_18] : memref<8x16x1xi32, #tpu.memory_space<vmem>>, vector<1x16x1xi32>
      %23 = vector.shape_cast %22 : vector<1x16x1xi32> to vector<16x1xi32>
      %c0_19 = arith.constant 0 : index
      %c0_20 = arith.constant 0 : index
      %24 = vector.load %arg16[%c0_19, %c0_20] : memref<16x1xi32, #tpu.memory_space<vmem>>, vector<16x1xi32>
      tpu.vector_store %arg16[%c0_19, %c0_20], %23 {strides = array<i32>} : memref<16x1xi32, #tpu.memory_space<vmem>>, vector<16x1xi32>,
    } else {
    }
    %c0_i32_1 = arith.constant 0 : i32
    %3 = arith.cmpi sgt, %arg0, %c0_i32_1 : i32
    %4 = arith.extui %3 : i1 to i32
    %c0_i32_2 = arith.constant 0 : i32
    %5 = arith.cmpi ne, %4, %c0_i32_2 : i32
    scf.if %5 {
      %c0 = arith.constant 0 : index
      %c0_3 = arith.constant 0 : index
      %6 = vector.load %arg16[%c0, %c0_3] : memref<16x1xi32, #tpu.memory_space<vmem>>, vector<1x1xi32>
      %7 = vector.extract %6[0, 0] : i32 from vector<1x1xi32>
      %8 = arith.index_cast %7 : i32 to index
      %c0_4 = arith.constant 0 : index
      %9 = vector.load %arg4[%8, %c0_4] : memref<128x128xf32, #tpu.memory_space<vmem>>, vector<1x128xf32>
      %c0_5 = arith.constant 0 : index
      %c0_6 = arith.constant 0 : index
      %10 = vector.load %arg15[%c0_5, %c0_6] : memref<16x128xf32, #tpu.memory_space<vmem>>, vector<1x128xf32>
      tpu.vector_store %arg15[%c0_5, %c0_6], %9 {strides = array<i32>} : memref<16x128xf32, #tpu.memory_space<vmem>>, vector<1x128xf32>,
      %c1 = arith.constant 1 : index
      %c0_7 = arith.constant 0 : index
      %11 = vector.load %arg16[%c1, %c0_7] : memref<16x1xi32, #tpu.memory_space<vmem>>, vector<1x1xi32>
      %12 = vector.extract %11[0, 0] : i32 from vector<1x1xi32>
      %13 = arith.index_cast %12 : i32 to index
      %c0_8 = arith.constant 0 : index
      %14 = vector.load %arg4[%13, %c0_8] : memref<128x128xf32, #tpu.memory_space<vmem>>, vector<1x128xf32>
      %c1_9 = arith.constant 1 : index
      %c0_10 = arith.constant 0 : index
      %15 = vector.load %arg15[%c1_9, %c0_10] : memref<16x128xf32, #tpu.memory_space<vmem>>, vector<1x128xf32>
      tpu.vector_store %arg15[%c1_9, %c0_10], %14 {strides = array<i32>} : memref<16x128xf32, #tpu.memory_space<vmem>>, vector<1x128xf32>,
      %c2 = arith.constant 2 : index
      %c0_11 = arith.constant 0 : index
      %16 = vector.load %arg16[%c2, %c0_11] : memref<16x1xi32, #tpu.memory_space<vmem>>, vector<1x1xi32>
      %17 = vector.extract %16[0, 0] : i32 from vector<1x1xi32>
      %18 = arith.index_cast %17 : i32 to index
      %c0_12 = arith.constant 0 : index
      %19 = vector.load %arg4[%18, %c0_12] : memref<128x128xf32, #tpu.memory_space<vmem>>, vector<1x128xf32>
      %c2_13 = arith.constant 2 : index
      %c0_14 = arith.constant 0 : index
      %20 = vector.load %arg15[%c2_13, %c0_14] : memref<16x128xf32, #tpu.memory_space<vmem>>, vector<1x128xf32>
      tpu.vector_store %arg15[%c2_13, %c0_14], %19 {strides = array<i32>} : memref<16x128xf32, #tpu.memory_space<vmem>>, vector<1x128xf32>,
      %c3 = arith.constant 3 : index
      %c0_15 = arith.constant 0 : index
      %21 = vector.load %arg16[%c3, %c0_15] : memref<16x1xi32, #tpu.memory_space<vmem>>, vector<1x1xi32>
      %22 = vector.extract %21[0, 0] : i32 from vector<1x1xi32>
      %23 = arith.index_cast %22 : i32 to index
      %c0_16 = arith.constant 0 : index
      %24 = vector.load %arg4[%23, %c0_16] : memref<128x128xf32, #tpu.memory_space<vmem>>, vector<1x128xf32>
      %c3_17 = arith.constant 3 : index
      %c0_18 = arith.constant 0 : index
      %25 = vector.load %arg15[%c3_17, %c0_18] : memref<16x128xf32, #tpu.memory_space<vmem>>, vector<1x128xf32>
      tpu.vector_store %arg15[%c3_17, %c0_18], %24 {strides = array<i32>} : memref<16x128xf32, #tpu.memory_space<vmem>>, vector<1x128xf32>,
      %c4 = arith.constant 4 : index
      %c0_19 = arith.constant 0 : index
      %26 = vector.load %arg16[%c4, %c0_19] : memref<16x1xi32, #tpu.memory_space<vmem>>, vector<1x1xi32>
      %27 = vector.extract %26[0, 0] : i32 from vector<1x1xi32>
      %28 = arith.index_cast %27 : i32 to index
      %c0_20 = arith.constant 0 : index
      %29 = vector.load %arg4[%28, %c0_20] : memref<128x128xf32, #tpu.memory_space<vmem>>, vector<1x128xf32>
      %c4_21 = arith.constant 4 : index
      %c0_22 = arith.constant 0 : index
      %30 = vector.load %arg15[%c4_21, %c0_22] : memref<16x128xf32, #tpu.memory_space<vmem>>, vector<1x128xf32>
      tpu.vector_store %arg15[%c4_21, %c0_22], %29 {strides = array<i32>} : memref<16x128xf32, #tpu.memory_space<vmem>>, vector<1x128xf32>,
      %c5 = arith.constant 5 : index
      %c0_23 = arith.constant 0 : index
      %31 = vector.load %arg16[%c5, %c0_23] : memref<16x1xi32, #tpu.memory_space<vmem>>, vector<1x1xi32>
      %32 = vector.extract %31[0, 0] : i32 from vector<1x1xi32>
      %33 = arith.index_cast %32 : i32 to index
      %c0_24 = arith.constant 0 : index
      %34 = vector.load %arg4[%33, %c0_24] : memref<128x128xf32, #tpu.memory_space<vmem>>, vector<1x128xf32>
      %c5_25 = arith.constant 5 : index
      %c0_26 = arith.constant 0 : index
      %35 = vector.load %arg15[%c5_25, %c0_26] : memref<16x128xf32, #tpu.memory_space<vmem>>, vector<1x128xf32>
      tpu.vector_store %arg15[%c5_25, %c0_26], %34 {strides = array<i32>} : memref<16x128xf32, #tpu.memory_space<vmem>>, vector<1x128xf32>,
      %c6 = arith.constant 6 : index
      %c0_27 = arith.constant 0 : index
      %36 = vector.load %arg16[%c6, %c0_27] : memref<16x1xi32, #tpu.memory_space<vmem>>, vector<1x1xi32>
      %37 = vector.extract %36[0, 0] : i32 from vector<1x1xi32>
      %38 = arith.index_cast %37 : i32 to index
      %c0_28 = arith.constant 0 : index
      %39 = vector.load %arg4[%38, %c0_28] : memref<128x128xf32, #tpu.memory_space<vmem>>, vector<1x128xf32>
      %c6_29 = arith.constant 6 : index
      %c0_30 = arith.constant 0 : index
      %40 = vector.load %arg15[%c6_29, %c0_30] : memref<16x128xf32, #tpu.memory_space<vmem>>, vector<1x128xf32>
      tpu.vector_store %arg15[%c6_29, %c0_30], %39 {strides = array<i32>} : memref<16x128xf32, #tpu.memory_space<vmem>>, vector<1x128xf32>,
      %c7 = arith.constant 7 : index
      %c0_31 = arith.constant 0 : index
      %41 = vector.load %arg16[%c7, %c0_31] : memref<16x1xi32, #tpu.memory_space<vmem>>, vector<1x1xi32>
      %42 = vector.extract %41[0, 0] : i32 from vector<1x1xi32>
      %43 = arith.index_cast %42 : i32 to index
      %c0_32 = arith.constant 0 : index
      %44 = vector.load %arg4[%43, %c0_32] : memref<128x128xf32, #tpu.memory_space<vmem>>, vector<1x128xf32>
      %c7_33 = arith.constant 7 : index
      %c0_34 = arith.constant 0 : index
      %45 = vector.load %arg15[%c7_33, %c0_34] : memref<16x128xf32, #tpu.memory_space<vmem>>, vector<1x128xf32>
      tpu.vector_store %arg15[%c7_33, %c0_34], %44 {strides = array<i32>} : memref<16x128xf32, #tpu.memory_space<vmem>>, vector<1x128xf32>,
      %c8 = arith.constant 8 : index
      %c0_35 = arith.constant 0 : index
      %46 = vector.load %arg16[%c8, %c0_35] : memref<16x1xi32, #tpu.memory_space<vmem>>, vector<1x1xi32>
      %47 = vector.extract %46[0, 0] : i32 from vector<1x1xi32>
      %48 = arith.index_cast %47 : i32 to index
      %c0_36 = arith.constant 0 : index
      %49 = vector.load %arg4[%48, %c0_36] : memref<128x128xf32, #tpu.memory_space<vmem>>, vector<1x128xf32>
      %c8_37 = arith.constant 8 : index
      %c0_38 = arith.constant 0 : index
      %50 = vector.load %arg15[%c8_37, %c0_38] : memref<16x128xf32, #tpu.memory_space<vmem>>, vector<1x128xf32>
      tpu.vector_store %arg15[%c8_37, %c0_38], %49 {strides = array<i32>} : memref<16x128xf32, #tpu.memory_space<vmem>>, vector<1x128xf32>,
      %c9 = arith.constant 9 : index
      %c0_39 = arith.constant 0 : index
      %51 = vector.load %arg16[%c9, %c0_39] : memref<16x1xi32, #tpu.memory_space<vmem>>, vector<1x1xi32>
      %52 = vector.extract %51[0, 0] : i32 from vector<1x1xi32>
      %53 = arith.index_cast %52 : i32 to index
      %c0_40 = arith.constant 0 : index
      %54 = vector.load %arg4[%53, %c0_40] : memref<128x128xf32, #tpu.memory_space<vmem>>, vector<1x128xf32>
      %c9_41 = arith.constant 9 : index
      %c0_42 = arith.constant 0 : index
      %55 = vector.load %arg15[%c9_41, %c0_42] : memref<16x128xf32, #tpu.memory_space<vmem>>, vector<1x128xf32>
      tpu.vector_store %arg15[%c9_41, %c0_42], %54 {strides = array<i32>} : memref<16x128xf32, #tpu.memory_space<vmem>>, vector<1x128xf32>,
      %c10 = arith.constant 10 : index
      %c0_43 = arith.constant 0 : index
      %56 = vector.load %arg16[%c10, %c0_43] : memref<16x1xi32, #tpu.memory_space<vmem>>, vector<1x1xi32>
      %57 = vector.extract %56[0, 0] : i32 from vector<1x1xi32>
      %58 = arith.index_cast %57 : i32 to index
      %c0_44 = arith.constant 0 : index
      %59 = vector.load %arg4[%58, %c0_44] : memref<128x128xf32, #tpu.memory_space<vmem>>, vector<1x128xf32>
      %c10_45 = arith.constant 10 : index
      %c0_46 = arith.constant 0 : index
      %60 = vector.load %arg15[%c10_45, %c0_46] : memref<16x128xf32, #tpu.memory_space<vmem>>, vector<1x128xf32>
      tpu.vector_store %arg15[%c10_45, %c0_46], %59 {strides = array<i32>} : memref<16x128xf32, #tpu.memory_space<vmem>>, vector<1x128xf32>,
      %c11 = arith.constant 11 : index
      %c0_47 = arith.constant 0 : index
      %61 = vector.load %arg16[%c11, %c0_47] : memref<16x1xi32, #tpu.memory_space<vmem>>, vector<1x1xi32>
      %62 = vector.extract %61[0, 0] : i32 from vector<1x1xi32>
      %63 = arith.index_cast %62 : i32 to index
      %c0_48 = arith.constant 0 : index
      %64 = vector.load %arg4[%63, %c0_48] : memref<128x128xf32, #tpu.memory_space<vmem>>, vector<1x128xf32>
      %c11_49 = arith.constant 11 : index
      %c0_50 = arith.constant 0 : index
      %65 = vector.load %arg15[%c11_49, %c0_50] : memref<16x128xf32, #tpu.memory_space<vmem>>, vector<1x128xf32>
      tpu.vector_store %arg15[%c11_49, %c0_50], %64 {strides = array<i32>} : memref<16x128xf32, #tpu.memory_space<vmem>>, vector<1x128xf32>,
      %c12 = arith.constant 12 : index
      %c0_51 = arith.constant 0 : index
      %66 = vector.load %arg16[%c12, %c0_51] : memref<16x1xi32, #tpu.memory_space<vmem>>, vector<1x1xi32>
      %67 = vector.extract %66[0, 0] : i32 from vector<1x1xi32>
      %68 = arith.index_cast %67 : i32 to index
      %c0_52 = arith.constant 0 : index
      %69 = vector.load %arg4[%68, %c0_52] : memref<128x128xf32, #tpu.memory_space<vmem>>, vector<1x128xf32>
      %c12_53 = arith.constant 12 : index
      %c0_54 = arith.constant 0 : index
      %70 = vector.load %arg15[%c12_53, %c0_54] : memref<16x128xf32, #tpu.memory_space<vmem>>, vector<1x128xf32>
      tpu.vector_store %arg15[%c12_53, %c0_54], %69 {strides = array<i32>} : memref<16x128xf32, #tpu.memory_space<vmem>>, vector<1x128xf32>,
      %c13 = arith.constant 13 : index
      %c0_55 = arith.constant 0 : index
      %71 = vector.load %arg16[%c13, %c0_55] : memref<16x1xi32, #tpu.memory_space<vmem>>, vector<1x1xi32>
      %72 = vector.extract %71[0, 0] : i32 from vector<1x1xi32>
      %73 = arith.index_cast %72 : i32 to index
      %c0_56 = arith.constant 0 : index
      %74 = vector.load %arg4[%73, %c0_56] : memref<128x128xf32, #tpu.memory_space<vmem>>, vector<1x128xf32>
      %c13_57 = arith.constant 13 : index
      %c0_58 = arith.constant 0 : index
      %75 = vector.load %arg15[%c13_57, %c0_58] : memref<16x128xf32, #tpu.memory_space<vmem>>, vector<1x128xf32>
      tpu.vector_store %arg15[%c13_57, %c0_58], %74 {strides = array<i32>} : memref<16x128xf32, #tpu.memory_space<vmem>>, vector<1x128xf32>,
      %c14 = arith.constant 14 : index
      %c0_59 = arith.constant 0 : index
      %76 = vector.load %arg16[%c14, %c0_59] : memref<16x1xi32, #tpu.memory_space<vmem>>, vector<1x1xi32>
      %77 = vector.extract %76[0, 0] : i32 from vector<1x1xi32>
      %78 = arith.index_cast %77 : i32 to index
      %c0_60 = arith.constant 0 : index
      %79 = vector.load %arg4[%78, %c0_60] : memref<128x128xf32, #tpu.memory_space<vmem>>, vector<1x128xf32>
      %c14_61 = arith.constant 14 : index
      %c0_62 = arith.constant 0 : index
      %80 = vector.load %arg15[%c14_61, %c0_62] : memref<16x128xf32, #tpu.memory_space<vmem>>, vector<1x128xf32>
      tpu.vector_store %arg15[%c14_61, %c0_62], %79 {strides = array<i32>} : memref<16x128xf32, #tpu.memory_space<vmem>>, vector<1x128xf32>,
      %c15 = arith.constant 15 : index
      %c0_63 = arith.constant 0 : index
      %81 = vector.load %arg16[%c15, %c0_63] : memref<16x1xi32, #tpu.memory_space<vmem>>, vector<1x1xi32>
      %82 = vector.extract %81[0, 0] : i32 from vector<1x1xi32>
      %83 = arith.index_cast %82 : i32 to index
      %c0_64 = arith.constant 0 : index
      %84 = vector.load %arg4[%83, %c0_64] : memref<128x128xf32, #tpu.memory_space<vmem>>, vector<1x128xf32>
      %c15_65 = arith.constant 15 : index
      %c0_66 = arith.constant 0 : index
      %85 = vector.load %arg15[%c15_65, %c0_66] : memref<16x128xf32, #tpu.memory_space<vmem>>, vector<1x128xf32>
      tpu.vector_store %arg15[%c15_65, %c0_66], %84 {strides = array<i32>} : memref<16x128xf32, #tpu.memory_space<vmem>>, vector<1x128xf32>,
      %c0_67 = arith.constant 0 : index
      %c0_68 = arith.constant 0 : index
      %86 = vector.load %arg15[%c0_67, %c0_68] : memref<16x128xf32, #tpu.memory_space<vmem>>, vector<16x128xf32>
      %87 = arith.truncf %86 : vector<16x128xf32> to vector<16x128xbf16>
      %c0_69 = arith.constant 0 : index
      %c0_70 = arith.constant 0 : index
      %88 = vector.load %arg13[%c0_69, %c0_70] : memref<16x128xf32, #tpu.memory_space<vmem>>, vector<16x128xf32>
      %c0_71 = arith.constant 0 : index
      %c0_72 = arith.constant 0 : index
      %89 = vector.load %arg7[%c0_71, %c0_72] : memref<128x512xbf16, #tpu.memory_space<vmem>>, vector<128x512xbf16>
      %cst = arith.constant dense<0.000000e+00> : vector<16x512xf32>
      %90 = tpu.matmul %87, %89, %cst {dimension_numbers = #tpu.dot_dimension_numbers<[1], [0], [0], [1], [0, 0, 1, 1], [], []>} : vector<16x128xbf16>, vector<128x512xbf16>, vector<16x512xf32> -> vector<16x512xf32>
      %91 = arith.truncf %88 : vector<16x128xf32> to vector<16x128xbf16>
      %c0_73 = arith.constant 0 : index
      %c0_74 = arith.constant 0 : index
      %92 = vector.load %arg8[%c0_73, %c0_74] : memref<128x512xbf16, #tpu.memory_space<vmem>>, vector<128x512xbf16>
      %cst_75 = arith.constant dense<0.000000e+00> : vector<16x512xf32>
      %93 = tpu.matmul %91, %92, %cst_75 {dimension_numbers = #tpu.dot_dimension_numbers<[1], [0], [0], [1], [0, 0, 1, 1], [], []>} : vector<16x128xbf16>, vector<128x512xbf16>, vector<16x512xf32> -> vector<16x512xf32>
      %94 = arith.addf %90, %93 : vector<16x512xf32>
      %c0_76 = arith.constant 0 : index
      %c0_77 = arith.constant 0 : index
      %95 = vector.load %arg9[%c0_76, %c0_77] : memref<1x512xf32, #tpu.memory_space<vmem>>, vector<1x512xf32>
      %96 = vector.broadcast %95 : vector<1x512xf32> to vector<16x512xf32>
      %97 = arith.addf %94, %96 : vector<16x512xf32>
      %98 = vector.extract_strided_slice %97 {offsets = [0, 0], sizes = [16, 128], strides = [1, 1]} : vector<16x512xf32> to vector<16x128xf32>
      %99 = arith.negf %98 : vector<16x128xf32>
      %100 = math.exp %99 : vector<16x128xf32>
      %cst_78 = arith.constant 1.000000e+00 : f32
      %101 = vector.broadcast %cst_78 : f32 to vector<16x128xf32>
      %102 = arith.addf %101, %100 : vector<16x128xf32>
      %103 = arith.divf %101, %102 : vector<16x128xf32>
      %104 = vector.extract_strided_slice %97 {offsets = [0, 128], sizes = [16, 128], strides = [1, 1]} : vector<16x512xf32> to vector<16x128xf32>
      %105 = arith.negf %104 : vector<16x128xf32>
      %106 = math.exp %105 : vector<16x128xf32>
      %cst_79 = arith.constant 1.000000e+00 : f32
      %107 = vector.broadcast %cst_79 : f32 to vector<16x128xf32>
      %108 = arith.addf %107, %106 : vector<16x128xf32>
      %109 = arith.divf %107, %108 : vector<16x128xf32>
      %110 = vector.extract_strided_slice %97 {offsets = [0, 256], sizes = [16, 128], strides = [1, 1]} : vector<16x512xf32> to vector<16x128xf32>
      %111 = math.tanh %110 : vector<16x128xf32>
      %112 = vector.extract_strided_slice %97 {offsets = [0, 384], sizes = [16, 128], strides = [1, 1]} : vector<16x512xf32> to vector<16x128xf32>
      %113 = arith.negf %112 : vector<16x128xf32>
      %114 = math.exp %113 : vector<16x128xf32>
      %cst_80 = arith.constant 1.000000e+00 : f32
      %115 = vector.broadcast %cst_80 : f32 to vector<16x128xf32>
      %116 = arith.addf %115, %114 : vector<16x128xf32>
      %117 = arith.divf %115, %116 : vector<16x128xf32>
      %c0_81 = arith.constant 0 : index
      %c0_82 = arith.constant 0 : index
      %118 = vector.load %arg14[%c0_81, %c0_82] : memref<16x128xf32, #tpu.memory_space<vmem>>, vector<16x128xf32>
      %119 = arith.mulf %109, %118 : vector<16x128xf32>
      %120 = arith.mulf %103, %111 : vector<16x128xf32>
      %121 = arith.addf %119, %120 : vector<16x128xf32>
      %122 = math.tanh %121 : vector<16x128xf32>
      %123 = arith.mulf %117, %122 : vector<16x128xf32>
      %c0_83 = arith.constant 0 : index
      %c0_84 = arith.constant 0 : index
      %124 = vector.load %arg13[%c0_83, %c0_84] : memref<16x128xf32, #tpu.memory_space<vmem>>, vector<16x128xf32>
      tpu.vector_store %arg13[%c0_83, %c0_84], %123 {strides = array<i32>} : memref<16x128xf32, #tpu.memory_space<vmem>>, vector<16x128xf32>,
      %c0_85 = arith.constant 0 : index
      %c0_86 = arith.constant 0 : index
      %125 = vector.load %arg14[%c0_85, %c0_86] : memref<16x128xf32, #tpu.memory_space<vmem>>, vector<16x128xf32>
      tpu.vector_store %arg14[%c0_85, %c0_86], %121 {strides = array<i32>} : memref<16x128xf32, #tpu.memory_space<vmem>>, vector<16x128xf32>,
      %126 = arith.truncf %123 : vector<16x128xf32> to vector<16x128xbf16>
      %c0_87 = arith.constant 0 : index
      %c0_88 = arith.constant 0 : index
      %127 = vector.load %arg10[%c0_87, %c0_88] : memref<128x128xbf16, #tpu.memory_space<vmem>>, vector<128x128xbf16>
      %cst_89 = arith.constant dense<0.000000e+00> : vector<16x128xf32>
      %128 = tpu.matmul %126, %127, %cst_89 {dimension_numbers = #tpu.dot_dimension_numbers<[1], [0], [0], [1], [0, 0, 1, 1], [], []>} : vector<16x128xbf16>, vector<128x128xbf16>, vector<16x128xf32> -> vector<16x128xf32>
      %c0_90 = arith.constant 0 : index
      %c0_91 = arith.constant 0 : index
      %129 = vector.load %arg11[%c0_90, %c0_91] : memref<1x128xf32, #tpu.memory_space<vmem>>, vector<1x128xf32>
      %130 = vector.broadcast %129 : vector<1x128xf32> to vector<16x128xf32>
      %131 = arith.addf %128, %130 : vector<16x128xf32>
      %c0_92 = arith.constant 0 : index
      %c0_93 = arith.constant 0 : index
      %c0_94 = arith.constant 0 : index
      %132 = vector.load %arg12[%c0_92, %c0_93, %c0_94] : memref<1x16x128xf32, #tpu.memory_space<vmem>>, vector<1x16x128xf32>
      %133 = vector.shape_cast %132 : vector<1x16x128xf32> to vector<16x128xf32>
      %134 = vector.shape_cast %131 : vector<16x128xf32> to vector<1x16x128xf32>
      tpu.vector_store %arg12[%c0_92, %c0_93, %c0_94], %134 {strides = array<i32>} : memref<1x16x128xf32, #tpu.memory_space<vmem>>, vector<1x16x128xf32>,
      %c7_i32 = arith.constant 7 : i32
      %135 = arith.cmpi slt, %arg0, %c7_i32 : i32
      %136 = arith.index_cast %arg0 : i32 to index
      %137 = memref.load %arg2[%136] : memref<8xi32, #tpu.memory_space<smem>>
      %c0_i32_95 = arith.constant 0 : i32
      %138 = arith.cmpi sgt, %137, %c0_i32_95 : i32
      %139 = arith.andi %135, %138 : i1
      %140 = arith.extui %139 : i1 to i32
      %c0_i32_96 = arith.constant 0 : i32
      %141 = arith.cmpi ne, %140, %c0_i32_96 : i32
      scf.if %141 {
        %146 = arith.index_cast %arg0 : i32 to index
        %c0_98 = arith.constant 0 : index
        %c0_99 = arith.constant 0 : index
        %147 = vector.load %arg1[%146, %c0_98, %c0_99] : memref<8x16x1xi32, #tpu.memory_space<vmem>>, vector<1x16x1xi32>
        %148 = vector.shape_cast %147 : vector<1x16x1xi32> to vector<16x1xi32>
        %c0_100 = arith.constant 0 : index
        %c0_101 = arith.constant 0 : index
        %149 = vector.load %arg16[%c0_100, %c0_101] : memref<16x1xi32, #tpu.memory_space<vmem>>, vector<16x1xi32>
        tpu.vector_store %arg16[%c0_100, %c0_101], %148 {strides = array<i32>} : memref<16x1xi32, #tpu.memory_space<vmem>>, vector<16x1xi32>,
      } else {
      }
      %true = arith.constant true
      %142 = arith.xori %138, %true : i1
      %143 = arith.andi %135, %142 : i1
      %144 = arith.extui %143 : i1 to i32
      %c0_i32_97 = arith.constant 0 : i32
      %145 = arith.cmpi ne, %144, %c0_i32_97 : i32
      scf.if %145 {
        %146 = tpu.iota {dimensions = array<i32: 1>} : vector<16x128xi32>
        %cst_98 = arith.constant dense<0xFF800000> : vector<16xf32>
        %147 = vector.multi_reduction <maximumf>, %131, %cst_98 [1] : vector<16x128xf32> to vector<16xf32>
        %148 = vector.shape_cast %147 : vector<16xf32> to vector<16x1xf32>
        %149 = vector.broadcast %148 : vector<16x1xf32> to vector<16x128xf32>
        %150 = arith.cmpf oeq, %131, %149 : vector<16x128xf32>
        %c128_i32 = arith.constant 128 : i32
        %151 = vector.broadcast %c128_i32 : i32 to vector<16x128xi32>
        %152 = arith.select %150, %146, %151 : vector<16x128xi1>, vector<16x128xi32>
        %cst_99 = arith.constant dense<2147483647> : vector<16xi32>
        %153 = vector.multi_reduction <minsi>, %152, %cst_99 [1] : vector<16x128xi32> to vector<16xi32>
        %154 = vector.shape_cast %153 : vector<16xi32> to vector<16x1xi32>
        %c0_100 = arith.constant 0 : index
        %c0_101 = arith.constant 0 : index
        %155 = vector.load %arg16[%c0_100, %c0_101] : memref<16x1xi32, #tpu.memory_space<vmem>>, vector<16x1xi32>
        tpu.vector_store %arg16[%c0_100, %c0_101], %154 {strides = array<i32>} : memref<16x1xi32, #tpu.memory_space<vmem>>, vector<16x1xi32>,
      } else {
      }
    } else {
    }
    return
  }
  func.func @transform_0(%arg0: i32) -> (i32, i32, i32) {
    %c0_i32 = arith.constant 0 : i32
    %c0_i32_0 = arith.constant 0 : i32
    %c0_i32_1 = arith.constant 0 : i32
    %c0_i32_2 = arith.constant 0 : i32
    return %c0_i32, %c0_i32_0, %c0_i32_1 : i32, i32, i32
  }
  func.func @transform_1(%arg0: i32) -> i32 {
    %c0_i32 = arith.constant 0 : i32
    %c0_i32_0 = arith.constant 0 : i32
    return %c0_i32 : i32
  }
  func.func @transform_2(%arg0: i32) -> (i32, i32) {
    %c0_i32 = arith.constant 0 : i32
    %c0_i32_0 = arith.constant 0 : i32
    %c0_i32_1 = arith.constant 0 : i32
    return %c0_i32, %c0_i32_0 : i32, i32
  }
  func.func @transform_3(%arg0: i32) -> (i32, i32) {
    %c0_i32 = arith.constant 0 : i32
    %c0_i32_0 = arith.constant 0 : i32
    %c0_i32_1 = arith.constant 0 : i32
    return %c0_i32, %c0_i32_0 : i32, i32
  }
  func.func @transform_4(%arg0: i32) -> (i32, i32) {
    %c0_i32 = arith.constant 0 : i32
    %c0_i32_0 = arith.constant 0 : i32
    %c0_i32_1 = arith.constant 0 : i32
    return %c0_i32, %c0_i32_0 : i32, i32
  }
  func.func @transform_5(%arg0: i32) -> (i32, i32) {
    %c0_i32 = arith.constant 0 : i32
    %c0_i32_0 = arith.constant 0 : i32
    %c0_i32_1 = arith.constant 0 : i32
    return %c0_i32, %c0_i32_0 : i32, i32
  }
  func.func @transform_6(%arg0: i32) -> (i32, i32) {
    %c0_i32 = arith.constant 0 : i32
    %c0_i32_0 = arith.constant 0 : i32
    %c0_i32_1 = arith.constant 0 : i32
    return %c0_i32, %c0_i32_0 : i32, i32
  }
  func.func @transform_7(%arg0: i32) -> (i32, i32) {
    %c0_i32 = arith.constant 0 : i32
    %c0_i32_0 = arith.constant 0 : i32
    %c0_i32_1 = arith.constant 0 : i32
    return %c0_i32, %c0_i32_0 : i32, i32
  }
  func.func @transform_8(%arg0: i32) -> (i32, i32) {
    %c0_i32 = arith.constant 0 : i32
    %c0_i32_0 = arith.constant 0 : i32
    %c0_i32_1 = arith.constant 0 : i32
    return %c0_i32, %c0_i32_0 : i32, i32
  }
  func.func @transform_9(%arg0: i32) -> (i32, i32) {
    %c0_i32 = arith.constant 0 : i32
    %c0_i32_0 = arith.constant 0 : i32
    %c0_i32_1 = arith.constant 0 : i32
    return %c0_i32, %c0_i32_0 : i32, i32
  }
  func.func @transform_10(%arg0: i32) -> (i32, i32) {
    %c0_i32 = arith.constant 0 : i32
    %c0_i32_0 = arith.constant 0 : i32
    %c0_i32_1 = arith.constant 0 : i32
    return %c0_i32, %c0_i32_0 : i32, i32
  }
  func.func @transform_11(%arg0: i32) -> (i32, i32, i32) {
    %c0_i32 = arith.constant 0 : i32
    %c0_i32_0 = arith.constant 0 : i32
    %c0_i32_1 = arith.constant 0 : i32
    return %arg0, %c0_i32, %c0_i32_0 : i32, i32, i32
  }
}

</mosaic_0001>

<llo_original>
// kernel: tpu_custom_call.1
$region0: #{tpu_custom_call.1}
  #allocation0 [shape = 'u32[]', space=smem, size = 0x4, offset = 0x4, fixed_abs, tag = 'smem constant byte address 0x4 - core index']
  #allocation1 [shape = 'u32[72,128]{1,0:T(1,128)}', space=vmem, size = 0x9000, scoped, tag = 'internal scratch']
  #allocation2 [shape = 'f32[16,128]{1,0:T(8,128)}', space=vmem, size = 0x2000, scoped, tag = 'scratch operand']
  #allocation3 [shape = 'f32[16,128]{1,0:T(8,128)}', space=vmem, size = 0x2000, scoped, tag = 'scratch operand']
  #allocation4 [shape = 'f32[16,128]{1,0:T(8,128)}', space=vmem, size = 0x2000, scoped, tag = 'scratch operand']
  #allocation5 [shape = 's32[16,1]{1,0:T(8,128)}', space=vmem, size = 0x2000, scoped, tag = 'scratch operand']
  %s0 = inlined_call_operand.vmem [shape: s32[8,16,1], index: 0, kind: input, shape index: {}]
  %s1 = inlined_call_operand.vmem [shape: s32[8], index: 1, kind: input, shape index: {}]
  %s2 = inlined_call_operand.hbm [shape: f32[16,128], index: 2, kind: input, shape index: {}]
  %s3 = inlined_call_operand.vmem [shape: f32[128,128], index: 3, kind: input, shape index: {}]
  %s4 = inlined_call_operand.hbm [shape: bf16[128,256], index: 4, kind: input, shape index: {}]
  %s5 = inlined_call_operand.vmem [shape: f32[1,256], index: 5, kind: input, shape index: {}]
  %s6 = inlined_call_operand.hbm [shape: bf16[128,512], index: 6, kind: input, shape index: {}]
  %s7 = inlined_call_operand.hbm [shape: bf16[128,512], index: 7, kind: input, shape index: {}]
  %s8 = inlined_call_operand.vmem [shape: f32[1,512], index: 8, kind: input, shape index: {}]
  %s9 = inlined_call_operand.hbm [shape: bf16[128,128], index: 9, kind: input, shape index: {}]
  %s10 = inlined_call_operand.vmem [shape: f32[1,128], index: 10, kind: input, shape index: {}]
  %s11 = inlined_call_operand.hbm [shape: f32[8,16,128], index: 11, kind: output, shape index: {}]
  %s12 = sld [smem:[#allocation0]]
  $region117: #{tpu_custom_call.1} parent=0
    _
  %s14 = ssub.s32 1, %s12
  %s15 = scalar_select 0, %s14, %s12
  $region1: #{tpu_custom_call.1} parent=0
    #allocation6 [shape = 'u8[512]{0}', space=smem, size = 0x200, scoped, tag = 'input window, operand 1, single buffered']
    #allocation7 [shape = 's32[2]{0}', space=sflag, size = 0x8, scoped, tag = 'scoped memory for tpu_custom_call.1']
    #allocation8 [shape = 's32[2]{0}', space=sflag, size = 0x8, scoped, tag = 'scoped memory for tpu_custom_call.1']
    #allocation9 [shape = 's32[2]{0}', space=sflag, size = 0x8, scoped, tag = 'scoped memory for tpu_custom_call.1']
    #allocation10 [shape = 'u8[8192]{0}', space=vmem, size = 0x2000, scoped, tag = 'input window, operand 2, single buffered']
    #allocation11 [shape = 'u8[65536]{0}', space=vmem, size = 0x10000, scoped, tag = 'input window, operand 4, single buffered']
    #allocation12 [shape = 's32[1]{0}', space=sflag, size = 0x4, scoped, tag = 'scoped memory for tpu_custom_call.1']
    #allocation13 [shape = 'u8[131072]{0}', space=vmem, size = 0x20000, scoped, tag = 'input window, operand 6, single buffered']
    #allocation14 [shape = 'u8[131072]{0}', space=vmem, size = 0x20000, scoped, tag = 'input window, operand 7, single buffered']
    #allocation15 [shape = 's32[1]{0}', space=sflag, size = 0x4, scoped, tag = 'scoped memory for tpu_custom_call.1']
    #allocation16 [shape = 'u8[32768]{0}', space=vmem, size = 0x8000, scoped, tag = 'input window, operand 9, single buffered']
    #allocation17 [shape = 'u8[16384]{0}', space=vmem, size = 0x4000, scoped, tag = 'output window, operand 0']
    %16 = vsyncpa [#allocation9], 0
    %17 = vsyncpa [#allocation7], 0
    %18 = vsyncpa [#allocation12], 0
    %19 = vsyncpa [#allocation15], 0
    %20 = vsyncpa [#allocation8], 0
    %s21 = scalar_lea.sflag [#allocation8], 1
    %22 = vsyncpa %s21, 0
    loop: start=0, step=1, limit=10
    $region2: #{tpu_custom_call.1} parent=1 // loop_pre_header
      _
    $region3: #{tpu_custom_call.1} parent=1 // loop_header
      %s24 = sphi 0, %s28
      %p25 = scmp.ge.s32.totalorder %s24, 10
      %s32 = sphi 0, %s32
      %s34 = sphi 0, %s32
      %s35 = sphi 0, %s34
      %s49 = sphi 0, %s35
      %s53 = sphi 0, %s53
      %s55 = sphi 0, %s53
      %s56 = sphi 0, %s55
      %s70 = sphi 0, %s56
      %s74 = sphi 0, %s74
      %s76 = sphi 0, %s74
      %s77 = sphi 0, %s76
      %s91 = sphi 0, %s77
      %s95 = sphi 0, %s95
      %s97 = sphi 0, %s95
      %s98 = sphi 0, %s97
      %s112 = sphi 0, %s98
      %s116 = sphi 0, %s116
      %s118 = sphi 0, %s116
      %s119 = sphi 0, %s118
      %s133 = sphi 0, %s119
      %s137 = sphi 0, %s137
      %s139 = sphi 0, %s137
      %s140 = sphi 0, %s139
      %s154 = sphi 0, %s140
      %s158 = sphi 0, %s158
      %s160 = sphi 0, %s158
      %s161 = sphi 0, %s160
      %s175 = sphi 0, %s161
      %s179 = sphi 0, %s179
      %s181 = sphi 0, %s179
      %s182 = sphi 0, %s181
      %s196 = sphi 0, %s182
      %s200 = sphi 0, %s200
      %s202 = sphi 0, %s200
      %s203 = sphi 0, %s202
      %s217 = sphi 0, %s203
      %s221 = sphi 0, %s221
      %s223 = sphi 0, %s221
      %s224 = sphi 0, %s223
      %s238 = sphi 0, %s224
      %s242 = sphi 0, %s242
      %s244 = sphi 0, %s242
      %s245 = sphi 0, %s244
      %s259 = sphi 0, %s245
      %s265 = sphi 0, %s267
      %s268 = sphi 0, %s265
      %s269 = sphi 0, %s268
      %s285 = sphi 0, %s269
    $region4: #{tpu_custom_call.1} parent=1 // loop_header_branch
      %27 = sbr.rel (%p25) target = $region8
    $region5: #{tpu_custom_call.1} parent=1 // loop_body
      %s29 = ssub.s32 %s24, 1
      %s30 = ssub.s32 %s24, 2
      %s31 = sadd.s32 %s24, 1
      %s33 = sadd.s32 %s32, 1
      %p36 = scmp.eq.s32.totalorder %s24, 7
      %p37 = scmp.ne.s32.totalorder %s32, %s34
      %p38 = scmp.eq.s32.totalorder %s24, 0
      %p39 = por %p37, %p38
      %p40 = scmp.ne.s32.totalorder %s32, %s34
      %p41 = scmp.eq.s32.totalorder %s29, 7
      %p42 = por %p40, %p41
      %p43 = scmp.ne.s32.totalorder %s34, %s35
      %p44 = scmp.eq.s32.totalorder %s29, 0
      %p45 = por %p43, %p44
      %p46 = scmp.ne.s32.totalorder %s34, %s35
      %p47 = scmp.eq.s32.totalorder %s30, 7
      %p48 = por %p46, %p47
      %p50 = scmp.ne.s32.totalorder %s35, %s49
      %p51 = scmp.eq.s32.totalorder %s30, 0
      %p52 = por %p50, %p51
      %s54 = sadd.s32 %s53, 1
      %p57 = scmp.eq.s32.totalorder %s24, 7
      %p58 = scmp.ne.s32.totalorder %s53, %s55
      %p59 = scmp.eq.s32.totalorder %s24, 0
      %p60 = por %p58, %p59
      %p61 = scmp.ne.s32.totalorder %s53, %s55
      %p62 = scmp.eq.s32.totalorder %s29, 7
      %p63 = por %p61, %p62
      %p64 = scmp.ne.s32.totalorder %s55, %s56
      %p65 = scmp.eq.s32.totalorder %s29, 0
      %p66 = por %p64, %p65
      %p67 = scmp.ne.s32.totalorder %s55, %s56
      %p68 = scmp.eq.s32.totalorder %s30, 7
      %p69 = por %p67, %p68
      %p71 = scmp.ne.s32.totalorder %s56, %s70
      %p72 = scmp.eq.s32.totalorder %s30, 0
      %p73 = por %p71, %p72
      %s75 = sadd.s32 %s74, 1
      %p78 = scmp.eq.s32.totalorder %s24, 7
      %p79 = scmp.ne.s32.totalorder %s74, %s76
      %p80 = scmp.eq.s32.totalorder %s24, 0
      %p81 = por %p79, %p80
      %p82 = scmp.ne.s32.totalorder %s74, %s76
      %p83 = scmp.eq.s32.totalorder %s29, 7
      %p84 = por %p82, %p83
      %p85 = scmp.ne.s32.totalorder %s76, %s77
      %p86 = scmp.eq.s32.totalorder %s29, 0
      %p87 = por %p85, %p86
      %p88 = scmp.ne.s32.totalorder %s76, %s77
      %p89 = scmp.eq.s32.totalorder %s30, 7
      %p90 = por %p88, %p89
      %p92 = scmp.ne.s32.totalorder %s77, %s91
      %p93 = scmp.eq.s32.totalorder %s30, 0
      %p94 = por %p92, %p93
      %s96 = sadd.s32 %s95, 1
      %p99 = scmp.eq.s32.totalorder %s24, 7
      %p100 = scmp.ne.s32.totalorder %s95, %s97
      %p101 = scmp.eq.s32.totalorder %s24, 0
      %p102 = por %p100, %p101
      %p103 = scmp.ne.s32.totalorder %s95, %s97
      %p104 = scmp.eq.s32.totalorder %s29, 7
      %p105 = por %p103, %p104
      %p106 = scmp.ne.s32.totalorder %s97, %s98
      %p107 = scmp.eq.s32.totalorder %s29, 0
      %p108 = por %p106, %p107
      %p109 = scmp.ne.s32.totalorder %s97, %s98
      %p110 = scmp.eq.s32.totalorder %s30, 7
      %p111 = por %p109, %p110
      %p113 = scmp.ne.s32.totalorder %s98, %s112
      %p114 = scmp.eq.s32.totalorder %s30, 0
      %p115 = por %p113, %p114
      %s117 = sadd.s32 %s116, 1
      %p120 = scmp.eq.s32.totalorder %s24, 7
      %p121 = scmp.ne.s32.totalorder %s116, %s118
      %p122 = scmp.eq.s32.totalorder %s24, 0
      %p123 = por %p121, %p122
      %p124 = scmp.ne.s32.totalorder %s116, %s118
      %p125 = scmp.eq.s32.totalorder %s29, 7
      %p126 = por %p124, %p125
      %p127 = scmp.ne.s32.totalorder %s118, %s119
      %p128 = scmp.eq.s32.totalorder %s29, 0
      %p129 = por %p127, %p128
      %p130 = scmp.ne.s32.totalorder %s118, %s119
      %p131 = scmp.eq.s32.totalorder %s30, 7
      %p132 = por %p130, %p131
      %p134 = scmp.ne.s32.totalorder %s119, %s133
      %p135 = scmp.eq.s32.totalorder %s30, 0
      %p136 = por %p134, %p135
      %s138 = sadd.s32 %s137, 1
      %p141 = scmp.eq.s32.totalorder %s24, 7
      %p142 = scmp.ne.s32.totalorder %s137, %s139
      %p143 = scmp.eq.s32.totalorder %s24, 0
      %p144 = por %p142, %p143
      %p145 = scmp.ne.s32.totalorder %s137, %s139
      %p146 = scmp.eq.s32.totalorder %s29, 7
      %p147 = por %p145, %p146
      %p148 = scmp.ne.s32.totalorder %s139, %s140
      %p149 = scmp.eq.s32.totalorder %s29, 0
      %p150 = por %p148, %p149
      %p151 = scmp.ne.s32.totalorder %s139, %s140
      %p152 = scmp.eq.s32.totalorder %s30, 7
      %p153 = por %p151, %p152
      %p155 = scmp.ne.s32.totalorder %s140, %s154
      %p156 = scmp.eq.s32.totalorder %s30, 0
      %p157 = por %p155, %p156
      %s159 = sadd.s32 %s158, 1
      %p162 = scmp.eq.s32.totalorder %s24, 7
      %p163 = scmp.ne.s32.totalorder %s158, %s160
      %p164 = scmp.eq.s32.totalorder %s24, 0
      %p165 = por %p163, %p164
      %p166 = scmp.ne.s32.totalorder %s158, %s160
      %p167 = scmp.eq.s32.totalorder %s29, 7
      %p168 = por %p166, %p167
      %p169 = scmp.ne.s32.totalorder %s160, %s161
      %p170 = scmp.eq.s32.totalorder %s29, 0
      %p171 = por %p169, %p170
      %p172 = scmp.ne.s32.totalorder %s160, %s161
      %p173 = scmp.eq.s32.totalorder %s30, 7
      %p174 = por %p172, %p173
      %p176 = scmp.ne.s32.totalorder %s161, %s175
      %p177 = scmp.eq.s32.totalorder %s30, 0
      %p178 = por %p176, %p177
      %s180 = sadd.s32 %s179, 1
      %p183 = scmp.eq.s32.totalorder %s24, 7
      %p184 = scmp.ne.s32.totalorder %s179, %s181
      %p185 = scmp.eq.s32.totalorder %s24, 0
      %p186 = por %p184, %p185
      %p187 = scmp.ne.s32.totalorder %s179, %s181
      %p188 = scmp.eq.s32.totalorder %s29, 7
      %p189 = por %p187, %p188
      %p190 = scmp.ne.s32.totalorder %s181, %s182
      %p191 = scmp.eq.s32.totalorder %s29, 0
      %p192 = por %p190, %p191
      %p193 = scmp.ne.s32.totalorder %s181, %s182
      %p194 = scmp.eq.s32.totalorder %s30, 7
      %p195 = por %p193, %p194
      %p197 = scmp.ne.s32.totalorder %s182, %s196
      %p198 = scmp.eq.s32.totalorder %s30, 0
      %p199 = por %p197, %p198
      %s201 = sadd.s32 %s200, 1
      %p204 = scmp.eq.s32.totalorder %s24, 7
      %p205 = scmp.ne.s32.totalorder %s200, %s202
      %p206 = scmp.eq.s32.totalorder %s24, 0
      %p207 = por %p205, %p206
      %p208 = scmp.ne.s32.totalorder %s200, %s202
      %p209 = scmp.eq.s32.totalorder %s29, 7
      %p210 = por %p208, %p209
      %p211 = scmp.ne.s32.totalorder %s202, %s203
      %p212 = scmp.eq.s32.totalorder %s29, 0
      %p213 = por %p211, %p212
      %p214 = scmp.ne.s32.totalorder %s202, %s203
      %p215 = scmp.eq.s32.totalorder %s30, 7
      %p216 = por %p214, %p215
      %p218 = scmp.ne.s32.totalorder %s203, %s217
      %p219 = scmp.eq.s32.totalorder %s30, 0
      %p220 = por %p218, %p219
      %s222 = sadd.s32 %s221, 1
      %p225 = scmp.eq.s32.totalorder %s24, 7
      %p226 = scmp.ne.s32.totalorder %s221, %s223
      %p227 = scmp.eq.s32.totalorder %s24, 0
      %p228 = por %p226, %p227
      %p229 = scmp.ne.s32.totalorder %s221, %s223
      %p230 = scmp.eq.s32.totalorder %s29, 7
      %p231 = por %p229, %p230
      %p232 = scmp.ne.s32.totalorder %s223, %s224
      %p233 = scmp.eq.s32.totalorder %s29, 0
      %p234 = por %p232, %p233
      %p235 = scmp.ne.s32.totalorder %s223, %s224
      %p236 = scmp.eq.s32.totalorder %s30, 7
      %p237 = por %p235, %p236
      %p239 = scmp.ne.s32.totalorder %s224, %s238
      %p240 = scmp.eq.s32.totalorder %s30, 0
      %p241 = por %p239, %p240
      %s243 = sadd.s32 %s242, 1
      %p246 = scmp.eq.s32.totalorder %s24, 7
      %p247 = scmp.ne.s32.totalorder %s242, %s244
      %p248 = scmp.eq.s32.totalorder %s24, 0
      %p249 = por %p247, %p248
      %p250 = scmp.ne.s32.totalorder %s242, %s244
      %p251 = scmp.eq.s32.totalorder %s29, 7
      %p252 = por %p250, %p251
      %p253 = scmp.ne.s32.totalorder %s244, %s245
      %p254 = scmp.eq.s32.totalorder %s29, 0
      %p255 = por %p253, %p254
      %p256 = scmp.ne.s32.totalorder %s244, %s245
      %p257 = scmp.eq.s32.totalorder %s30, 7
      %p258 = por %p256, %p257
      %p260 = scmp.ne.s32.totalorder %s245, %s259
      %p261 = scmp.eq.s32.totalorder %s30, 0
      %p262 = por %p260, %p261
      %s263 = ssub.s32 %s24, %s31
      %p264 = scmp.eq.s32.totalorder %s263, 0
      %s266 = sadd.s32 %s265, 1
      %s267 = scalar_select %p264, %s265, %s266
      %p270 = pneg %p264
      %p271 = scmp.eq.s32.totalorder %s24, 7
      %p272 = por %p270, %p271
      %p273 = scmp.ne.s32.totalorder %s265, %s268
      %p274 = scmp.eq.s32.totalorder %s24, 0
      %p275 = por %p273, %p274
      %p276 = scmp.ne.s32.totalorder %s265, %s268
      %p277 = scmp.eq.s32.totalorder %s29, 7
      %p278 = por %p276, %p277
      %p279 = scmp.ne.s32.totalorder %s268, %s269
      %p280 = scmp.eq.s32.totalorder %s29, 0
      %p281 = por %p279, %p280
      %p282 = scmp.ne.s32.totalorder %s268, %s269
      %p283 = scmp.eq.s32.totalorder %s30, 7
      %p284 = por %p282, %p283
      %p286 = scmp.ne.s32.totalorder %s269, %s285
      %p287 = scmp.eq.s32.totalorder %s30, 0
      %p288 = por %p286, %p287
      %p289 = scmp.le.s32.totalorder 1, %s24
      %p290 = scmp.lt.s32.totalorder %s24, 9
      %p291 = pnand %p289, %p290
      %p292 = pneg %p291
      // Predicated region
      $region9: #{tpu_custom_call.1} parent=5 // pred_check
        _
      $region10: #{tpu_custom_call.1} parent=5 // pred_check_branch
        %294 = sbr.rel (%p291) target = $region12
      $region11: #{tpu_custom_call.1} parent=5 // pred_region
        %s295 = ssub.s32 %s24, 1
        // Predicated region
        $region13: #{tpu_custom_call.1} parent=11 // pred_check
          %p296 = pneg %p45
        $region14: #{tpu_custom_call.1} parent=11 // pred_check_branch
          %298 = sbr.rel (%p296) target = $region16
        $region15: #{tpu_custom_call.1} parent=11 // pred_region
          _
        $region16: #{tpu_custom_call.1} parent=11 // pred_fallthru
          _
        // Predicated region
        $region17: #{tpu_custom_call.1} parent=11 // pred_check
          %p299 = pneg %p66
        $region18: #{tpu_custom_call.1} parent=11 // pred_check_branch
          %301 = sbr.rel (%p299) target = $region20
        $region19: #{tpu_custom_call.1} parent=11 // pred_region
          %303 = vsyncadd [#allocation9], 0
          %s305 = sshll.u32 %s1, 4
          %s306 = int_to_ptr.vmem [resolvable:$true] %s305
          %308 = dma.vmem_to_smem %s306, 16, [#allocation6], [#allocation9]
        $region20: #{tpu_custom_call.1} parent=11 // pred_fallthru
          _
        // Predicated region
        $region21: #{tpu_custom_call.1} parent=11 // pred_check
          %p309 = pneg %p87
        $region22: #{tpu_custom_call.1} parent=11 // pred_check_branch
          %311 = sbr.rel (%p309) target = $region24
        $region23: #{tpu_custom_call.1} parent=11 // pred_region
          %313 = vsyncadd [#allocation7], 0
          %s314 = sshll.u32 %s2, 4
          %s315 = int_to_ptr.hbm [resolvable:$true] %s314
          %s316 = sshll.u32 [#allocation10], 4
          %s317 = int_to_ptr.vmem [resolvable:$true] %s316
          %322 = dma.hbm_to_vmem [thread:$0]  %s315, 256, %s317, [#allocation7], 128, 128, 8
        $region24: #{tpu_custom_call.1} parent=11 // pred_fallthru
          _
        // Predicated region
        $region25: #{tpu_custom_call.1} parent=11 // pred_check
          %p323 = pneg %p108
        $region26: #{tpu_custom_call.1} parent=11 // pred_check_branch
          %325 = sbr.rel (%p323) target = $region28
        $region27: #{tpu_custom_call.1} parent=11 // pred_region
          _
        $region28: #{tpu_custom_call.1} parent=11 // pred_fallthru
          _
        // Predicated region
        $region29: #{tpu_custom_call.1} parent=11 // pred_check
          %p326 = pneg %p129
        $region30: #{tpu_custom_call.1} parent=11 // pred_check_branch
          %328 = sbr.rel (%p326) target = $region32
        $region31: #{tpu_custom_call.1} parent=11 // pred_region
          %330 = vsyncadd [#allocation12], 0
          %s331 = sshll.u32 %s4, 4
          %s332 = int_to_ptr.hbm [resolvable:$true] %s331
          %s333 = sshll.u32 [#allocation11], 4
          %s334 = int_to_ptr.vmem [resolvable:$true] %s333
          %339 = dma.hbm_to_vmem [thread:$0]  %s332, 2048, %s334, [#allocation12], 128, 128, 8
        $region32: #{tpu_custom_call.1} parent=11 // pred_fallthru
          _
        // Predicated region
        $region33: #{tpu_custom_call.1} parent=11 // pred_check
          %p340 = pneg %p150
        $region34: #{tpu_custom_call.1} parent=11 // pred_check_branch
          %342 = sbr.rel (%p340) target = $region36
        $region35: #{tpu_custom_call.1} parent=11 // pred_region
          _
        $region36: #{tpu_custom_call.1} parent=11 // pred_fallthru
          _
        // Predicated region
        $region37: #{tpu_custom_call.1} parent=11 // pred_check
          %p343 = pneg %p171
        $region38: #{tpu_custom_call.1} parent=11 // pred_check_branch
          %345 = sbr.rel (%p343) target = $region40
        $region39: #{tpu_custom_call.1} parent=11 // pred_region
          %347 = vsyncadd [#allocation12], 0
          %s348 = sshll.u32 %s6, 4
          %s349 = int_to_ptr.hbm [resolvable:$true] %s348
          %s350 = sshll.u32 [#allocation13], 4
          %s351 = int_to_ptr.vmem [resolvable:$true] %s350
          %356 = dma.hbm_to_vmem [thread:$0]  %s349, 4096, %s351, [#allocation12], 256, 256, 16
        $region40: #{tpu_custom_call.1} parent=11 // pred_fallthru
          _
        // Predicated region
        $region41: #{tpu_custom_call.1} parent=11 // pred_check
          %p357 = pneg %p192
        $region42: #{tpu_custom_call.1} parent=11 // pred_check_branch
          %359 = sbr.rel (%p357) target = $region44
        $region43: #{tpu_custom_call.1} parent=11 // pred_region
          %361 = vsyncadd [#allocation15], 0
          %s362 = sshll.u32 %s7, 4
          %s363 = int_to_ptr.hbm [resolvable:$true] %s362
          %s364 = sshll.u32 [#allocation14], 4
          %s365 = int_to_ptr.vmem [resolvable:$true] %s364
          %370 = dma.hbm_to_vmem [thread:$0]  %s363, 4096, %s365, [#allocation15], 256, 256, 16
        $region44: #{tpu_custom_call.1} parent=11 // pred_fallthru
          _
        // Predicated region
        $region45: #{tpu_custom_call.1} parent=11 // pred_check
          %p371 = pneg %p213
        $region46: #{tpu_custom_call.1} parent=11 // pred_check_branch
          %373 = sbr.rel (%p371) target = $region48
        $region47: #{tpu_custom_call.1} parent=11 // pred_region
          _
        $region48: #{tpu_custom_call.1} parent=11 // pred_fallthru
          _
        // Predicated region
        $region49: #{tpu_custom_call.1} parent=11 // pred_check
          %p374 = pneg %p234
        $region50: #{tpu_custom_call.1} parent=11 // pred_check_branch
          %376 = sbr.rel (%p374) target = $region52
        $region51: #{tpu_custom_call.1} parent=11 // pred_region
          %378 = vsyncadd [#allocation15], 0
          %s379 = sshll.u32 %s9, 4
          %s380 = int_to_ptr.hbm [resolvable:$true] %s379
          %s381 = sshll.u32 [#allocation16], 4
          %s382 = int_to_ptr.vmem [resolvable:$true] %s381
          %387 = dma.hbm_to_vmem [thread:$0]  %s380, 1024, %s382, [#allocation15], 64, 64, 4
        $region52: #{tpu_custom_call.1} parent=11 // pred_fallthru
          _
        // Predicated region
        $region53: #{tpu_custom_call.1} parent=11 // pred_check
          %p388 = pneg %p255
        $region54: #{tpu_custom_call.1} parent=11 // pred_check_branch
          %390 = sbr.rel (%p388) target = $region56
        $region55: #{tpu_custom_call.1} parent=11 // pred_region
          _
        $region56: #{tpu_custom_call.1} parent=11 // pred_fallthru
          _
      $region12: #{tpu_custom_call.1} parent=5 // pred_fallthru
        _
      %p391 = scmp.lt.s32.totalorder %s24, 8
      // Predicated region
      $region57: #{tpu_custom_call.1} parent=5 // pred_check
        %p392 = pneg %p391
      $region58: #{tpu_custom_call.1} parent=5 // pred_check_branch
        %394 = sbr.rel (%p392) target = $region60
      $region59: #{tpu_custom_call.1} parent=5 // pred_region
        _
      $region60: #{tpu_custom_call.1} parent=5 // pred_fallthru
        _
      %p395 = scmp.le.s32.totalorder 1, %s24
      %p396 = scmp.lt.s32.totalorder %s24, 9
      %p397 = pnand %p395, %p396
      %p398 = pneg %p397
      // Predicated region
      $region61: #{tpu_custom_call.1} parent=5 // pred_check
        _
      $region62: #{tpu_custom_call.1} parent=5 // pred_check_branch
        %400 = sbr.rel (%p397) target = $region64
      $region63: #{tpu_custom_call.1} parent=5 // pred_region
        %s401 = ssub.s32 %s24, 1
        // Predicated region
        $region65: #{tpu_custom_call.1} parent=63 // pred_check
          %p402 = pneg %p66
        $region66: #{tpu_custom_call.1} parent=63 // pred_check_branch
          %404 = sbr.rel (%p402) target = $region68
        $region67: #{tpu_custom_call.1} parent=63 // pred_region
          %406 = dma.done [#allocation9], 16
        $region68: #{tpu_custom_call.1} parent=63 // pred_fallthru
          _
        // Predicated region
        $region69: #{tpu_custom_call.1} parent=63 // pred_check
          %p407 = pneg %p87
        $region70: #{tpu_custom_call.1} parent=63 // pred_check_branch
          %409 = sbr.rel (%p407) target = $region72
        $region71: #{tpu_custom_call.1} parent=63 // pred_region
          %411 = dma.done [#allocation7], 256
        $region72: #{tpu_custom_call.1} parent=63 // pred_fallthru
          _
        // Predicated region
        $region73: #{tpu_custom_call.1} parent=63 // pred_check
          %p412 = pneg %p129
        $region74: #{tpu_custom_call.1} parent=63 // pred_check_branch
          %414 = sbr.rel (%p412) target = $region76
        $region75: #{tpu_custom_call.1} parent=63 // pred_region
          %416 = dma.done [#allocation12], 2048
        $region76: #{tpu_custom_call.1} parent=63 // pred_fallthru
          _
        // Predicated region
        $region77: #{tpu_custom_call.1} parent=63 // pred_check
          %p417 = pneg %p171
        $region78: #{tpu_custom_call.1} parent=63 // pred_check_branch
          %419 = sbr.rel (%p417) target = $region80
        $region79: #{tpu_custom_call.1} parent=63 // pred_region
          %421 = dma.done [#allocation12], 4096
        $region80: #{tpu_custom_call.1} parent=63 // pred_fallthru
          _
        // Predicated region
        $region81: #{tpu_custom_call.1} parent=63 // pred_check
          %p422 = pneg %p192
        $region82: #{tpu_custom_call.1} parent=63 // pred_check_branch
          %424 = sbr.rel (%p422) target = $region84
        $region83: #{tpu_custom_call.1} parent=63 // pred_region
          %426 = dma.done [#allocation15], 4096
        $region84: #{tpu_custom_call.1} parent=63 // pred_fallthru
          _
        // Predicated region
        $region85: #{tpu_custom_call.1} parent=63 // pred_check
          %p427 = pneg %p234
        $region86: #{tpu_custom_call.1} parent=63 // pred_check_branch
          %429 = sbr.rel (%p427) target = $region88
        $region87: #{tpu_custom_call.1} parent=63 // pred_region
          %431 = dma.done [#allocation15], 1024
        $region88: #{tpu_custom_call.1} parent=63 // pred_fallthru
          _
        %432 = sfence
        %p433 = pneg %p45
        %p434 = pneg %p42
        %p435 = pneg %p66
        %p436 = pneg %p63
        %p437 = pneg %p87
        %p438 = pneg %p84
        %p439 = pneg %p108
        %p440 = pneg %p105
        %p441 = pneg %p129
        %p442 = pneg %p126
        %p443 = pneg %p150
        %p444 = pneg %p147
        %p445 = pneg %p171
        %p446 = pneg %p168
        %p447 = pneg %p192
        %p448 = pneg %p189
        %p449 = pneg %p213
        %p450 = pneg %p210
        %p451 = pneg %p234
        %p452 = pneg %p231
        %p453 = pneg %p255
        %p454 = pneg %p252
        %p455 = pneg %p281
        %p456 = pneg %p278
        %s457 = sand.u32 %s268, 1
        %s458 = scalar_lea.sflag [#allocation8], %s457
        %s459 = sand.u32 %s268, 1
        %s460 = smul.addr %s459, 16
        %s461 = scalar_lea.vmem [#allocation17], %s460
        %p462 = scmp.eq.s32.totalorder %s29, 0
        // Predicated region
        $region89: #{tpu_custom_call.1} parent=63 // pred_check
          %p463 = pneg %p462
        $region90: #{tpu_custom_call.1} parent=63 // pred_check_branch
          %465 = sbr.rel (%p463) target = $region92
        $region91: #{tpu_custom_call.1} parent=63 // pred_region
          %466 = vst [vmem:[%s461] sm:$0xff] 0.0
          %467 = vst [vmem:[%s461 + $0x8] sm:$0xff] 0.0
          %v468 = vld [vmem:[#allocation10] sm:$0xff]
          %v469 = vld [vmem:[#allocation10 + $0x8] sm:$0xff]
          %v470 = vpack.c.bf16 %v469, %v468
          %v471 = vld [vmem:[#allocation11] sm:$0xff]
          %v472 = vld [vmem:[#allocation11 + $0x8] sm:$0xff]
          %v473 = vld [vmem:[#allocation11 + $0x10] sm:$0xff]
          %v474 = vld [vmem:[#allocation11 + $0x18] sm:$0xff]
          %v475 = vld [vmem:[#allocation11 + $0x20] sm:$0xff]
          %v476 = vld [vmem:[#allocation11 + $0x28] sm:$0xff]
          %v477 = vld [vmem:[#allocation11 + $0x30] sm:$0xff]
          %v478 = vld [vmem:[#allocation11 + $0x38] sm:$0xff]
          %v479 = vld [vmem:[#allocation11 + $0x40] sm:$0xff]
          %v480 = vld [vmem:[#allocation11 + $0x48] sm:$0xff]
          %v481 = vld [vmem:[#allocation11 + $0x50] sm:$0xff]
          %v482 = vld [vmem:[#allocation11 + $0x58] sm:$0xff]
          %v483 = vld [vmem:[#allocation11 + $0x60] sm:$0xff]
          %v484 = vld [vmem:[#allocation11 + $0x68] sm:$0xff]
          %v485 = vld [vmem:[#allocation11 + $0x70] sm:$0xff]
          %v486 = vld [vmem:[#allocation11 + $0x78] sm:$0xff]
          %v487 = vld [vmem:[%s5] sm:$0x3]
          %v489 = vperm.slane %v487, 0
          %v490 = vperm.slane %v487, 1
          %v509 = vunpack.c.l.b16 %v471
          %v510 = vunpack.c.h.b16 %v471
          %v511 = vunpack.c.l.b16 %v472
          %v512 = vunpack.c.h.b16 %v472
          %v513 = vunpack.c.l.b16 %v473
          %v514 = vunpack.c.h.b16 %v473
          %v515 = vunpack.c.l.b16 %v474
          %v516 = vunpack.c.h.b16 %v474
          %v517 = vunpack.c.l.b16 %v475
          %v518 = vunpack.c.h.b16 %v475
          %v519 = vunpack.c.l.b16 %v476
          %v520 = vunpack.c.h.b16 %v476
          %v521 = vunpack.c.l.b16 %v477
          %v522 = vunpack.c.h.b16 %v477
          %v523 = vunpack.c.l.b16 %v478
          %v524 = vunpack.c.h.b16 %v478
          %v525 = vunpack.c.l.b16 %v479
          %v526 = vunpack.c.h.b16 %v479
          %v527 = vunpack.c.l.b16 %v480
          %v528 = vunpack.c.h.b16 %v480
          %v529 = vunpack.c.l.b16 %v481
          %v530 = vunpack.c.h.b16 %v481
          %v531 = vunpack.c.l.b16 %v482
          %v532 = vunpack.c.h.b16 %v482
          %v533 = vunpack.c.l.b16 %v483
          %v534 = vunpack.c.h.b16 %v483
          %v535 = vunpack.c.l.b16 %v484
          %v536 = vunpack.c.h.b16 %v484
          %v537 = vunpack.c.l.b16 %v485
          %v538 = vunpack.c.h.b16 %v485
          %v539 = vunpack.c.l.b16 %v486
          %v540 = vunpack.c.h.b16 %v486
          %v541 = vpack.c.b16 %v511, %v509
          %v542 = vpack.c.b16 %v512, %v510
          %v543 = vpack.c.b16 %v515, %v513
          %v544 = vpack.c.b16 %v516, %v514
          %v545 = vpack.c.b16 %v519, %v517
          %v546 = vpack.c.b16 %v520, %v518
          %v547 = vpack.c.b16 %v523, %v521
          %v548 = vpack.c.b16 %v524, %v522
          %v549 = vpack.c.b16 %v527, %v525
          %v550 = vpack.c.b16 %v528, %v526
          %v551 = vpack.c.b16 %v531, %v529
          %v552 = vpack.c.b16 %v532, %v530
          %v553 = vpack.c.b16 %v535, %v533
          %v554 = vpack.c.b16 %v536, %v534
          %v555 = vpack.c.b16 %v539, %v537
          %v556 = vpack.c.b16 %v540, %v538
          %573 = vmatpush.bf16.msra.mxu0 %v555
          %574 = vmatpush.bf16.msra.mxu0 %v553
          %575 = vmatpush.bf16.msra.mxu0 %v551
          %576 = vmatpush.bf16.msra.mxu0 %v549
          %577 = vmatpush.bf16.msra.mxu0 %v547
          %578 = vmatpush.bf16.msra.mxu0 %v545
          %579 = vmatpush.bf16.msra.mxu0 %v543
          %580 = vmatpush.bf16.msra.mxu0 %v541
          %581 = vmatmul.bf16.gmra.mxu0 %v470
          %v582 = vpop.f32.mrf.mxu0
          %v583 = vadd.f32 %v489, %v582
          %v584 = vpop.f32.mrf.mxu0
          %v585 = vadd.f32 %v489, %v584
          %586 = vdwg.mxu0
          %587 = vmatpush.bf16.msra.mxu0 %v556
          %588 = vmatpush.bf16.msra.mxu0 %v554
          %589 = vmatpush.bf16.msra.mxu0 %v552
          %590 = vmatpush.bf16.msra.mxu0 %v550
          %591 = vmatpush.bf16.msra.mxu0 %v548
          %592 = vmatpush.bf16.msra.mxu0 %v546
          %593 = vmatpush.bf16.msra.mxu0 %v544
          %594 = vmatpush.bf16.msra.mxu0 %v542
          %595 = vmatmul.bf16.gmra.mxu0 %v470
          %v596 = vpop.f32.mrf.mxu0
          %v597 = vadd.f32 %v490, %v596
          %v598 = vpop.f32.mrf.mxu0
          %v599 = vadd.f32 %v490, %v598
          %600 = vdwg.mxu0
          %v601 = vtanh.pop %v583
          %v602 = vtanh.pop %v597
          %v603 = vtanh.pop %v585
          %v604 = vtanh.pop %v599
          %605 = vst [vmem:[#allocation2] sm:$0xff] %v601
          %606 = vst [vmem:[#allocation2 + $0x8] sm:$0xff] %v603
          %607 = vst [vmem:[#allocation3] sm:$0xff] %v602
          %608 = vst [vmem:[#allocation3 + $0x8] sm:$0xff] %v604
          %v609 = vld [vmem:[%s0] sm:$0xff]
          %v610 = vld [vmem:[%s0 + $0x8] sm:$0xff]
          %vm611 = vcmask 7168
          %612 = vst.msk [vmem:[#allocation5] sm:$0xff] %vm611, %v609
          %613 = vst.msk [vmem:[#allocation5 + $0x8] sm:$0xff] %vm611, %v610
        $region92: #{tpu_custom_call.1} parent=63 // pred_fallthru
          _
        %p614 = scmp.gt.s32.totalorder %s29, 0
        // Predicated region
        $region93: #{tpu_custom_call.1} parent=63 // pred_check
          %p615 = pneg %p614
        $region94: #{tpu_custom_call.1} parent=63 // pred_check_branch
          %617 = sbr.rel (%p615) target = $region96
        $region95: #{tpu_custom_call.1} parent=63 // pred_region
          %v618 = vld [vmem:[#allocation5] sm:$0x1]
          %s619 = vtos %v618
          %s620 = scalar_lea.vmem %s3, %s619
          %v621 = vld [vmem:[%s620] sm:$0x1]
          %622 = vst [vmem:[#allocation4] sm:$0x1] %v621
          %v623 = vld [vmem:[#allocation5 + $0x1] sm:$0x1]
          %s624 = vtos %v623
          %s625 = scalar_lea.vmem %s3, %s624
          %v626 = vld [vmem:[%s625] sm:$0x1]
          %627 = vst [vmem:[#allocation4 + $0x1] sm:$0x1] %v626
          %v628 = vld [vmem:[#allocation5 + $0x2] sm:$0x1]
          %s629 = vtos %v628
          %s630 = scalar_lea.vmem %s3, %s629
          %v631 = vld [vmem:[%s630] sm:$0x1]
          %632 = vst [vmem:[#allocation4 + $0x2] sm:$0x1] %v631
          %v633 = vld [vmem:[#allocation5 + $0x3] sm:$0x1]
          %s634 = vtos %v633
          %s635 = scalar_lea.vmem %s3, %s634
          %v636 = vld [vmem:[%s635] sm:$0x1]
          %637 = vst [vmem:[#allocation4 + $0x3] sm:$0x1] %v636
          %v638 = vld [vmem:[#allocation5 + $0x4] sm:$0x1]
          %s639 = vtos %v638
          %s640 = scalar_lea.vmem %s3, %s639
          %v641 = vld [vmem:[%s640] sm:$0x1]
          %642 = vst [vmem:[#allocation4 + $0x4] sm:$0x1] %v641
          %v643 = vld [vmem:[#allocation5 + $0x5] sm:$0x1]
          %s644 = vtos %v643
          %s645 = scalar_lea.vmem %s3, %s644
          %v646 = vld [vmem:[%s645] sm:$0x1]
          %647 = vst [vmem:[#allocation4 + $0x5] sm:$0x1] %v646
          %v648 = vld [vmem:[#allocation5 + $0x6] sm:$0x1]
          %s649 = vtos %v648
          %s650 = scalar_lea.vmem %s3, %s649
          %v651 = vld [vmem:[%s650] sm:$0x1]
          %652 = vst [vmem:[#allocation4 + $0x6] sm:$0x1] %v651
          %v653 = vld [vmem:[#allocation5 + $0x7] sm:$0x1]
          %s654 = vtos %v653
          %s655 = scalar_lea.vmem %s3, %s654
          %v656 = vld [vmem:[%s655] sm:$0x1]
          %657 = vst [vmem:[#allocation4 + $0x7] sm:$0x1] %v656
          %v658 = vld [vmem:[#allocation5 + $0x8] sm:$0x1]
          %s659 = vtos %v658
          %s660 = scalar_lea.vmem %s3, %s659
          %v661 = vld [vmem:[%s660] sm:$0x1]
          %662 = vst [vmem:[#allocation4 + $0x8] sm:$0x1] %v661
          %v663 = vld [vmem:[#allocation5 + $0x9] sm:$0x1]
          %s664 = vtos %v663
          %s665 = scalar_lea.vmem %s3, %s664
          %v666 = vld [vmem:[%s665] sm:$0x1]
          %667 = vst [vmem:[#allocation4 + $0x9] sm:$0x1] %v666
          %v668 = vld [vmem:[#allocation5 + $0xa] sm:$0x1]
          %s669 = vtos %v668
          %s670 = scalar_lea.vmem %s3, %s669
          %v671 = vld [vmem:[%s670] sm:$0x1]
          %672 = vst [vmem:[#allocation4 + $0xa] sm:$0x1] %v671
          %v673 = vld [vmem:[#allocation5 + $0xb] sm:$0x1]
          %s674 = vtos %v673
          %s675 = scalar_lea.vmem %s3, %s674
          %v676 = vld [vmem:[%s675] sm:$0x1]
          %677 = vst [vmem:[#allocation4 + $0xb] sm:$0x1] %v676
          %v678 = vld [vmem:[#allocation5 + $0xc] sm:$0x1]
          %s679 = vtos %v678
          %s680 = scalar_lea.vmem %s3, %s679
          %v681 = vld [vmem:[%s680] sm:$0x1]
          %682 = vst [vmem:[#allocation4 + $0xc] sm:$0x1] %v681
          %v683 = vld [vmem:[#allocation5 + $0xd] sm:$0x1]
          %s684 = vtos %v683
          %s685 = scalar_lea.vmem %s3, %s684
          %v686 = vld [vmem:[%s685] sm:$0x1]
          %687 = vst [vmem:[#allocation4 + $0xd] sm:$0x1] %v686
          %v688 = vld [vmem:[#allocation5 + $0xe] sm:$0x1]
          %s689 = vtos %v688
          %s690 = scalar_lea.vmem %s3, %s689
          %v691 = vld [vmem:[%s690] sm:$0x1]
          %692 = vst [vmem:[#allocation4 + $0xe] sm:$0x1] %v691
          %v693 = vld [vmem:[#allocation5 + $0xf] sm:$0x1]
          %s694 = vtos %v693
          %s695 = scalar_lea.vmem %s3, %s694
          %v696 = vld [vmem:[%s695] sm:$0x1]
          %697 = vst [vmem:[#allocation4 + $0xf] sm:$0x1] %v696
          %v698 = vld [vmem:[#allocation4] sm:$0xff]
          %v699 = vld [vmem:[#allocation4 + $0x8] sm:$0xff]
          %v700 = vpack.c.bf16 %v699, %v698
          %v701 = vld [vmem:[#allocation2] sm:$0xff]
          %v702 = vld [vmem:[#allocation2 + $0x8] sm:$0xff]
          %v703 = vld [vmem:[#allocation13] sm:$0xff]
          %v704 = vld [vmem:[#allocation13 + $0x8] sm:$0xff]
          %v705 = vld [vmem:[#allocation13 + $0x10] sm:$0xff]
          %v706 = vld [vmem:[#allocation13 + $0x18] sm:$0xff]
          %v707 = vld [vmem:[#allocation13 + $0x20] sm:$0xff]
          %v708 = vld [vmem:[#allocation13 + $0x28] sm:$0xff]
          %v709 = vld [vmem:[#allocation13 + $0x30] sm:$0xff]
          %v710 = vld [vmem:[#allocation13 + $0x38] sm:$0xff]
          %v711 = vld [vmem:[#allocation13 + $0x40] sm:$0xff]
          %v712 = vld [vmem:[#allocation13 + $0x48] sm:$0xff]
          %v713 = vld [vmem:[#allocation13 + $0x50] sm:$0xff]
          %v714 = vld [vmem:[#allocation13 + $0x58] sm:$0xff]
          %v715 = vld [vmem:[#allocation13 + $0x60] sm:$0xff]
          %v716 = vld [vmem:[#allocation13 + $0x68] sm:$0xff]
          %v717 = vld [vmem:[#allocation13 + $0x70] sm:$0xff]
          %v718 = vld [vmem:[#allocation13 + $0x78] sm:$0xff]
          %v719 = vld [vmem:[#allocation13 + $0x80] sm:$0xff]
          %v720 = vld [vmem:[#allocation13 + $0x88] sm:$0xff]
          %v721 = vld [vmem:[#allocation13 + $0x90] sm:$0xff]
          %v722 = vld [vmem:[#allocation13 + $0x98] sm:$0xff]
          %v723 = vld [vmem:[#allocation13 + $0xa0] sm:$0xff]
          %v724 = vld [vmem:[#allocation13 + $0xa8] sm:$0xff]
          %v725 = vld [vmem:[#allocation13 + $0xb0] sm:$0xff]
          %v726 = vld [vmem:[#allocation13 + $0xb8] sm:$0xff]
          %v727 = vld [vmem:[#allocation13 + $0xc0] sm:$0xff]
          %v728 = vld [vmem:[#allocation13 + $0xc8] sm:$0xff]
          %v729 = vld [vmem:[#allocation13 + $0xd0] sm:$0xff]
          %v730 = vld [vmem:[#allocation13 + $0xd8] sm:$0xff]
          %v731 = vld [vmem:[#allocation13 + $0xe0] sm:$0xff]
          %v732 = vld [vmem:[#allocation13 + $0xe8] sm:$0xff]
          %v733 = vld [vmem:[#allocation13 + $0xf0] sm:$0xff]
          %v734 = vld [vmem:[#allocation13 + $0xf8] sm:$0xff]
          %v735 = vpack.c.bf16 %v702, %v701
          %v736 = vld [vmem:[#allocation14] sm:$0xff]
          %v737 = vld [vmem:[#allocation14 + $0x8] sm:$0xff]
          %v738 = vld [vmem:[#allocation14 + $0x10] sm:$0xff]
          %v739 = vld [vmem:[#allocation14 + $0x18] sm:$0xff]
          %v740 = vld [vmem:[#allocation14 + $0x20] sm:$0xff]
          %v741 = vld [vmem:[#allocation14 + $0x28] sm:$0xff]
          %v742 = vld [vmem:[#allocation14 + $0x30] sm:$0xff]
          %v743 = vld [vmem:[#allocation14 + $0x38] sm:$0xff]
          %v744 = vld [vmem:[#allocation14 + $0x40] sm:$0xff]
          %v745 = vld [vmem:[#allocation14 + $0x48] sm:$0xff]
          %v746 = vld [vmem:[#allocation14 + $0x50] sm:$0xff]
          %v747 = vld [vmem:[#allocation14 + $0x58] sm:$0xff]
          %v748 = vld [vmem:[#allocation14 + $0x60] sm:$0xff]
          %v749 = vld [vmem:[#allocation14 + $0x68] sm:$0xff]
          %v750 = vld [vmem:[#allocation14 + $0x70] sm:$0xff]
          %v751 = vld [vmem:[#allocation14 + $0x78] sm:$0xff]
          %v752 = vld [vmem:[#allocation14 + $0x80] sm:$0xff]
          %v753 = vld [vmem:[#allocation14 + $0x88] sm:$0xff]
          %v754 = vld [vmem:[#allocation14 + $0x90] sm:$0xff]
          %v755 = vld [vmem:[#allocation14 + $0x98] sm:$0xff]
          %v756 = vld [vmem:[#allocation14 + $0xa0] sm:$0xff]
          %v757 = vld [vmem:[#allocation14 + $0xa8] sm:$0xff]
          %v758 = vld [vmem:[#allocation14 + $0xb0] sm:$0xff]
          %v759 = vld [vmem:[#allocation14 + $0xb8] sm:$0xff]
          %v760 = vld [vmem:[#allocation14 + $0xc0] sm:$0xff]
          %v761 = vld [vmem:[#allocation14 + $0xc8] sm:$0xff]
          %v762 = vld [vmem:[#allocation14 + $0xd0] sm:$0xff]
          %v763 = vld [vmem:[#allocation14 + $0xd8] sm:$0xff]
          %v764 = vld [vmem:[#allocation14 + $0xe0] sm:$0xff]
          %v765 = vld [vmem:[#allocation14 + $0xe8] sm:$0xff]
          %v766 = vld [vmem:[#allocation14 + $0xf0] sm:$0xff]
          %v767 = vld [vmem:[#allocation14 + $0xf8] sm:$0xff]
          %v800 = vunpack.c.l.b16 %v736
          %v801 = vunpack.c.h.b16 %v736
          %v802 = vunpack.c.l.b16 %v737
          %v803 = vunpack.c.h.b16 %v737
          %v804 = vunpack.c.l.b16 %v738
          %v805 = vunpack.c.h.b16 %v738
          %v806 = vunpack.c.l.b16 %v739
          %v807 = vunpack.c.h.b16 %v739
          %v808 = vunpack.c.l.b16 %v740
          %v809 = vunpack.c.h.b16 %v740
          %v810 = vunpack.c.l.b16 %v741
          %v811 = vunpack.c.h.b16 %v741
          %v812 = vunpack.c.l.b16 %v742
          %v813 = vunpack.c.h.b16 %v742
          %v814 = vunpack.c.l.b16 %v743
          %v815 = vunpack.c.h.b16 %v743
          %v816 = vunpack.c.l.b16 %v744
          %v817 = vunpack.c.h.b16 %v744
          %v818 = vunpack.c.l.b16 %v745
          %v819 = vunpack.c.h.b16 %v745
          %v820 = vunpack.c.l.b16 %v746
          %v821 = vunpack.c.h.b16 %v746
          %v822 = vunpack.c.l.b16 %v747
          %v823 = vunpack.c.h.b16 %v747
          %v824 = vunpack.c.l.b16 %v748
          %v825 = vunpack.c.h.b16 %v748
          %v826 = vunpack.c.l.b16 %v749
          %v827 = vunpack.c.h.b16 %v749
          %v828 = vunpack.c.l.b16 %v750
          %v829 = vunpack.c.h.b16 %v750
          %v830 = vunpack.c.l.b16 %v751
          %v831 = vunpack.c.h.b16 %v751
          %v832 = vunpack.c.l.b16 %v752
          %v833 = vunpack.c.h.b16 %v752
          %v834 = vunpack.c.l.b16 %v753
          %v835 = vunpack.c.h.b16 %v753
          %v836 = vunpack.c.l.b16 %v754
          %v837 = vunpack.c.h.b16 %v754
          %v838 = vunpack.c.l.b16 %v755
          %v839 = vunpack.c.h.b16 %v755
          %v840 = vunpack.c.l.b16 %v756
          %v841 = vunpack.c.h.b16 %v756
          %v842 = vunpack.c.l.b16 %v757
          %v843 = vunpack.c.h.b16 %v757
          %v844 = vunpack.c.l.b16 %v758
          %v845 = vunpack.c.h.b16 %v758
          %v846 = vunpack.c.l.b16 %v759
          %v847 = vunpack.c.h.b16 %v759
          %v848 = vunpack.c.l.b16 %v760
          %v849 = vunpack.c.h.b16 %v760
          %v850 = vunpack.c.l.b16 %v761
          %v851 = vunpack.c.h.b16 %v761
          %v852 = vunpack.c.l.b16 %v762
          %v853 = vunpack.c.h.b16 %v762
          %v854 = vunpack.c.l.b16 %v763
          %v855 = vunpack.c.h.b16 %v763
          %v856 = vunpack.c.l.b16 %v764
          %v857 = vunpack.c.h.b16 %v764
          %v858 = vunpack.c.l.b16 %v765
          %v859 = vunpack.c.h.b16 %v765
          %v860 = vunpack.c.l.b16 %v766
          %v861 = vunpack.c.h.b16 %v766
          %v862 = vunpack.c.l.b16 %v767
          %v863 = vunpack.c.h.b16 %v767
          %v864 = vpack.c.b16 %v804, %v800
          %v865 = vpack.c.b16 %v805, %v801
          %v866 = vpack.c.b16 %v806, %v802
          %v867 = vpack.c.b16 %v807, %v803
          %v868 = vpack.c.b16 %v812, %v808
          %v869 = vpack.c.b16 %v813, %v809
          %v870 = vpack.c.b16 %v814, %v810
          %v871 = vpack.c.b16 %v815, %v811
          %v872 = vpack.c.b16 %v820, %v816
          %v873 = vpack.c.b16 %v821, %v817
          %v874 = vpack.c.b16 %v822, %v818
          %v875 = vpack.c.b16 %v823, %v819
          %v876 = vpack.c.b16 %v828, %v824
          %v877 = vpack.c.b16 %v829, %v825
          %v878 = vpack.c.b16 %v830, %v826
          %v879 = vpack.c.b16 %v831, %v827
          %v880 = vpack.c.b16 %v836, %v832
          %v881 = vpack.c.b16 %v837, %v833
          %v882 = vpack.c.b16 %v838, %v834
          %v883 = vpack.c.b16 %v839, %v835
          %v884 = vpack.c.b16 %v844, %v840
          %v885 = vpack.c.b16 %v845, %v841
          %v886 = vpack.c.b16 %v846, %v842
          %v887 = vpack.c.b16 %v847, %v843
          %v888 = vpack.c.b16 %v852, %v848
          %v889 = vpack.c.b16 %v853, %v849
          %v890 = vpack.c.b16 %v854, %v850
          %v891 = vpack.c.b16 %v855, %v851
          %v892 = vpack.c.b16 %v860, %v856
          %v893 = vpack.c.b16 %v861, %v857
          %v894 = vpack.c.b16 %v862, %v858
          %v895 = vpack.c.b16 %v863, %v859
          %928 = vmatpush.bf16.msra.mxu0 %v892
          %929 = vmatpush.bf16.msra.mxu0 %v888
          %930 = vmatpush.bf16.msra.mxu0 %v884
          %931 = vmatpush.bf16.msra.mxu0 %v880
          %932 = vmatpush.bf16.msra.mxu0 %v876
          %933 = vmatpush.bf16.msra.mxu0 %v872
          %934 = vmatpush.bf16.msra.mxu0 %v868
          %935 = vmatpush.bf16.msra.mxu0 %v864
          %936 = vmatmul.bf16.gmra.mxu0 %v735
          %v937 = vpop.f32.mrf.mxu0
          %v938 = vadd.f32 0.0, %v937
          %v939 = vpop.f32.mrf.mxu0
          %v940 = vadd.f32 0.0, %v939
          %941 = vdwg.mxu0
          %942 = vmatpush.bf16.msra.mxu0 %v893
          %943 = vmatpush.bf16.msra.mxu0 %v889
          %944 = vmatpush.bf16.msra.mxu0 %v885
          %945 = vmatpush.bf16.msra.mxu0 %v881
          %946 = vmatpush.bf16.msra.mxu0 %v877
          %947 = vmatpush.bf16.msra.mxu0 %v873
          %948 = vmatpush.bf16.msra.mxu0 %v869
          %949 = vmatpush.bf16.msra.mxu0 %v865
          %950 = vmatmul.bf16.gmra.mxu0 %v735
          %v951 = vpop.f32.mrf.mxu0
          %v952 = vadd.f32 0.0, %v951
          %v953 = vpop.f32.mrf.mxu0
          %v954 = vadd.f32 0.0, %v953
          %955 = vdwg.mxu0
          %956 = vmatpush.bf16.msra.mxu0 %v894
          %957 = vmatpush.bf16.msra.mxu0 %v890
          %958 = vmatpush.bf16.msra.mxu0 %v886
          %959 = vmatpush.bf16.msra.mxu0 %v882
          %960 = vmatpush.bf16.msra.mxu0 %v878
          %961 = vmatpush.bf16.msra.mxu0 %v874
          %962 = vmatpush.bf16.msra.mxu0 %v870
          %963 = vmatpush.bf16.msra.mxu0 %v866
          %964 = vmatmul.bf16.gmra.mxu0 %v735
          %v965 = vpop.f32.mrf.mxu0
          %v966 = vadd.f32 0.0, %v965
          %v967 = vpop.f32.mrf.mxu0
          %v968 = vadd.f32 0.0, %v967
          %969 = vdwg.mxu0
          %970 = vmatpush.bf16.msra.mxu0 %v895
          %971 = vmatpush.bf16.msra.mxu0 %v891
          %972 = vmatpush.bf16.msra.mxu0 %v887
          %973 = vmatpush.bf16.msra.mxu0 %v883
          %974 = vmatpush.bf16.msra.mxu0 %v879
          %975 = vmatpush.bf16.msra.mxu0 %v875
          %976 = vmatpush.bf16.msra.mxu0 %v871
          %977 = vmatpush.bf16.msra.mxu0 %v867
          %978 = vmatmul.bf16.gmra.mxu0 %v735
          %v979 = vpop.f32.mrf.mxu0
          %v980 = vadd.f32 0.0, %v979
          %v981 = vpop.f32.mrf.mxu0
          %v982 = vadd.f32 0.0, %v981
          %983 = vdwg.mxu0
          %v1016 = vunpack.c.l.b16 %v703
          %v1017 = vunpack.c.h.b16 %v703
          %v1018 = vunpack.c.l.b16 %v704
          %v1019 = vunpack.c.h.b16 %v704
          %v1020 = vunpack.c.l.b16 %v705
          %v1021 = vunpack.c.h.b16 %v705
          %v1022 = vunpack.c.l.b16 %v706
          %v1023 = vunpack.c.h.b16 %v706
          %v1024 = vunpack.c.l.b16 %v707
          %v1025 = vunpack.c.h.b16 %v707
          %v1026 = vunpack.c.l.b16 %v708
          %v1027 = vunpack.c.h.b16 %v708
          %v1028 = vunpack.c.l.b16 %v709
          %v1029 = vunpack.c.h.b16 %v709
          %v1030 = vunpack.c.l.b16 %v710
          %v1031 = vunpack.c.h.b16 %v710
          %v1032 = vunpack.c.l.b16 %v711
          %v1033 = vunpack.c.h.b16 %v711
          %v1034 = vunpack.c.l.b16 %v712
          %v1035 = vunpack.c.h.b16 %v712
          %v1036 = vunpack.c.l.b16 %v713
          %v1037 = vunpack.c.h.b16 %v713
          %v1038 = vunpack.c.l.b16 %v714
          %v1039 = vunpack.c.h.b16 %v714
          %v1040 = vunpack.c.l.b16 %v715
          %v1041 = vunpack.c.h.b16 %v715
          %v1042 = vunpack.c.l.b16 %v716
          %v1043 = vunpack.c.h.b16 %v716
          %v1044 = vunpack.c.l.b16 %v717
          %v1045 = vunpack.c.h.b16 %v717
          %v1046 = vunpack.c.l.b16 %v718
          %v1047 = vunpack.c.h.b16 %v718
          %v1048 = vunpack.c.l.b16 %v719
          %v1049 = vunpack.c.h.b16 %v719
          %v1050 = vunpack.c.l.b16 %v720
          %v1051 = vunpack.c.h.b16 %v720
          %v1052 = vunpack.c.l.b16 %v721
          %v1053 = vunpack.c.h.b16 %v721
          %v1054 = vunpack.c.l.b16 %v722
          %v1055 = vunpack.c.h.b16 %v722
          %v1056 = vunpack.c.l.b16 %v723
          %v1057 = vunpack.c.h.b16 %v723
          %v1058 = vunpack.c.l.b16 %v724
          %v1059 = vunpack.c.h.b16 %v724
          %v1060 = vunpack.c.l.b16 %v725
          %v1061 = vunpack.c.h.b16 %v725
          %v1062 = vunpack.c.l.b16 %v726
          %v1063 = vunpack.c.h.b16 %v726
          %v1064 = vunpack.c.l.b16 %v727
          %v1065 = vunpack.c.h.b16 %v727
          %v1066 = vunpack.c.l.b16 %v728
          %v1067 = vunpack.c.h.b16 %v728
          %v1068 = vunpack.c.l.b16 %v729
          %v1069 = vunpack.c.h.b16 %v729
          %v1070 = vunpack.c.l.b16 %v730
          %v1071 = vunpack.c.h.b16 %v730
          %v1072 = vunpack.c.l.b16 %v731
          %v1073 = vunpack.c.h.b16 %v731
          %v1074 = vunpack.c.l.b16 %v732
          %v1075 = vunpack.c.h.b16 %v732
          %v1076 = vunpack.c.l.b16 %v733
          %v1077 = vunpack.c.h.b16 %v733
          %v1078 = vunpack.c.l.b16 %v734
          %v1079 = vunpack.c.h.b16 %v734
          %v1080 = vpack.c.b16 %v1020, %v1016
          %v1081 = vpack.c.b16 %v1021, %v1017
          %v1082 = vpack.c.b16 %v1022, %v1018
          %v1083 = vpack.c.b16 %v1023, %v1019
          %v1084 = vpack.c.b16 %v1028, %v1024
          %v1085 = vpack.c.b16 %v1029, %v1025
          %v1086 = vpack.c.b16 %v1030, %v1026
          %v1087 = vpack.c.b16 %v1031, %v1027
          %v1088 = vpack.c.b16 %v1036, %v1032
          %v1089 = vpack.c.b16 %v1037, %v1033
          %v1090 = vpack.c.b16 %v1038, %v1034
          %v1091 = vpack.c.b16 %v1039, %v1035
          %v1092 = vpack.c.b16 %v1044, %v1040
          %v1093 = vpack.c.b16 %v1045, %v1041
          %v1094 = vpack.c.b16 %v1046, %v1042
          %v1095 = vpack.c.b16 %v1047, %v1043
          %v1096 = vpack.c.b16 %v1052, %v1048
          %v1097 = vpack.c.b16 %v1053, %v1049
          %v1098 = vpack.c.b16 %v1054, %v1050
          %v1099 = vpack.c.b16 %v1055, %v1051
          %v1100 = vpack.c.b16 %v1060, %v1056
          %v1101 = vpack.c.b16 %v1061, %v1057
          %v1102 = vpack.c.b16 %v1062, %v1058
          %v1103 = vpack.c.b16 %v1063, %v1059
          %v1104 = vpack.c.b16 %v1068, %v1064
          %v1105 = vpack.c.b16 %v1069, %v1065
          %v1106 = vpack.c.b16 %v1070, %v1066
          %v1107 = vpack.c.b16 %v1071, %v1067
          %v1108 = vpack.c.b16 %v1076, %v1072
          %v1109 = vpack.c.b16 %v1077, %v1073
          %v1110 = vpack.c.b16 %v1078, %v1074
          %v1111 = vpack.c.b16 %v1079, %v1075
          %1144 = vmatpush.bf16.msra.mxu0 %v1108
          %1145 = vmatpush.bf16.msra.mxu0 %v1104
          %1146 = vmatpush.bf16.msra.mxu0 %v1100
          %1147 = vmatpush.bf16.msra.mxu0 %v1096
          %1148 = vmatpush.bf16.msra.mxu0 %v1092
          %1149 = vmatpush.bf16.msra.mxu0 %v1088
          %1150 = vmatpush.bf16.msra.mxu0 %v1084
          %1151 = vmatpush.bf16.msra.mxu0 %v1080
          %1152 = vmatmul.bf16.gmra.mxu0 %v700
          %v1153 = vpop.f32.mrf.mxu0
          %v1154 = vadd.f32 %v938, %v1153
          %v1155 = vpop.f32.mrf.mxu0
          %v1156 = vadd.f32 %v940, %v1155
          %1157 = vdwg.mxu0
          %1158 = vmatpush.bf16.msra.mxu0 %v1109
          %1159 = vmatpush.bf16.msra.mxu0 %v1105
          %1160 = vmatpush.bf16.msra.mxu0 %v1101
          %1161 = vmatpush.bf16.msra.mxu0 %v1097
          %1162 = vmatpush.bf16.msra.mxu0 %v1093
          %1163 = vmatpush.bf16.msra.mxu0 %v1089
          %1164 = vmatpush.bf16.msra.mxu0 %v1085
          %1165 = vmatpush.bf16.msra.mxu0 %v1081
          %1166 = vmatmul.bf16.gmra.mxu0 %v700
          %v1167 = vpop.f32.mrf.mxu0
          %v1168 = vadd.f32 %v952, %v1167
          %v1169 = vpop.f32.mrf.mxu0
          %v1170 = vadd.f32 %v954, %v1169
          %1171 = vdwg.mxu0
          %1172 = vmatpush.bf16.msra.mxu0 %v1110
          %1173 = vmatpush.bf16.msra.mxu0 %v1106
          %1174 = vmatpush.bf16.msra.mxu0 %v1102
          %1175 = vmatpush.bf16.msra.mxu0 %v1098
          %1176 = vmatpush.bf16.msra.mxu0 %v1094
          %1177 = vmatpush.bf16.msra.mxu0 %v1090
          %1178 = vmatpush.bf16.msra.mxu0 %v1086
          %1179 = vmatpush.bf16.msra.mxu0 %v1082
          %1180 = vmatmul.bf16.gmra.mxu0 %v700
          %v1181 = vpop.f32.mrf.mxu0
          %v1182 = vadd.f32 %v966, %v1181
          %v1183 = vpop.f32.mrf.mxu0
          %v1184 = vadd.f32 %v968, %v1183
          %1185 = vdwg.mxu0
          %1186 = vmatpush.bf16.msra.mxu0 %v1111
          %1187 = vmatpush.bf16.msra.mxu0 %v1107
          %1188 = vmatpush.bf16.msra.mxu0 %v1103
          %1189 = vmatpush.bf16.msra.mxu0 %v1099
          %1190 = vmatpush.bf16.msra.mxu0 %v1095
          %1191 = vmatpush.bf16.msra.mxu0 %v1091
          %1192 = vmatpush.bf16.msra.mxu0 %v1087
          %1193 = vmatpush.bf16.msra.mxu0 %v1083
          %1194 = vmatmul.bf16.gmra.mxu0 %v700
          %v1195 = vpop.f32.mrf.mxu0
          %v1196 = vadd.f32 %v980, %v1195
          %v1197 = vpop.f32.mrf.mxu0
          %v1198 = vadd.f32 %v982, %v1197
          %1199 = vdwg.mxu0
          %v1200 = vld [vmem:[%s8] sm:$0xf]
          %v1202 = vperm.slane %v1200, 0
          %v1203 = vperm.slane %v1200, 1
          %v1204 = vperm.slane %v1200, 2
          %v1205 = vperm.slane %v1200, 3
          %v1210 = vadd.f32 %v1154, %v1202
          %v1211 = vadd.f32 %v1168, %v1203
          %v1212 = vadd.f32 %v1182, %v1204
          %v1213 = vadd.f32 %v1196, %v1205
          %v1214 = vadd.f32 %v1156, %v1202
          %v1215 = vadd.f32 %v1170, %v1203
          %v1216 = vadd.f32 %v1184, %v1204
          %v1217 = vadd.f32 %v1198, %v1205
          %v1218 = vxor.u32 %v1210, 2147483648
          %v1219 = vxor.u32 %v1214, 2147483648
          %v1220 = vmul.f32 %v1218, 1.442695
          %v1221 = vpow.pop %v1220
          %v1222 = vmul.f32 %v1219, 1.442695
          %v1223 = vpow.pop %v1222
          %v1224 = vadd.f32 %v1221, 1.0
          %v1225 = vadd.f32 %v1223, 1.0
          %v1226 = vrcp.pop %v1224
          %v1227 = vmul.f32 %v1224, %v1226
          %v1228 = vsub.f32 1.0, %v1227
          %v1229 = vmul.f32 %v1226, %v1228
          %v1230 = vadd.f32 %v1226, %v1229
          %vm1231 = vweird.f32 %v1224
          %vm1232 = vweird.f32 %v1226
          %vm1233 = vmor %vm1231, %vm1232
          %v1234 = vsel %vm1233, %v1226, %v1230
          %v1235 = vand.u32 2147483647, %v1224
          %vm1236 = vcmp.eq.f32.partialorder %v1235, 8.507059e+37
          %v1237 = vand.u32 %v1224, 2147483648
          %v1238 = vor.u32 1.1754944e-38, %v1237
          %v1239 = vsel %vm1236, %v1238, %v1234
          %v1240 = vmul.f32 1.0, %v1239
          %v1241 = vrcp.pop %v1225
          %v1242 = vmul.f32 %v1225, %v1241
          %v1243 = vsub.f32 1.0, %v1242
          %v1244 = vmul.f32 %v1241, %v1243
          %v1245 = vadd.f32 %v1241, %v1244
          %vm1246 = vweird.f32 %v1225
          %vm1247 = vweird.f32 %v1241
          %vm1248 = vmor %vm1246, %vm1247
          %v1249 = vsel %vm1248, %v1241, %v1245
          %v1250 = vand.u32 2147483647, %v1225
          %vm1251 = vcmp.eq.f32.partialorder %v1250, 8.507059e+37
          %v1252 = vand.u32 %v1225, 2147483648
          %v1253 = vor.u32 1.1754944e-38, %v1252
          %v1254 = vsel %vm1251, %v1253, %v1249
          %v1255 = vmul.f32 1.0, %v1254
          %v1256 = vxor.u32 %v1211, 2147483648
          %v1257 = vxor.u32 %v1215, 2147483648
          %v1258 = vmul.f32 %v1256, 1.442695
          %v1259 = vpow.pop %v1258
          %v1260 = vmul.f32 %v1257, 1.442695
          %v1261 = vpow.pop %v1260
          %v1262 = vadd.f32 %v1259, 1.0
          %v1263 = vadd.f32 %v1261, 1.0
          %v1264 = vrcp.pop %v1262
          %v1265 = vmul.f32 %v1262, %v1264
          %v1266 = vsub.f32 1.0, %v1265
          %v1267 = vmul.f32 %v1264, %v1266
          %v1268 = vadd.f32 %v1264, %v1267
          %vm1269 = vweird.f32 %v1262
          %vm1270 = vweird.f32 %v1264
          %vm1271 = vmor %vm1269, %vm1270
          %v1272 = vsel %vm1271, %v1264, %v1268
          %v1273 = vand.u32 2147483647, %v1262
          %vm1274 = vcmp.eq.f32.partialorder %v1273, 8.507059e+37
          %v1275 = vand.u32 %v1262, 2147483648
          %v1276 = vor.u32 1.1754944e-38, %v1275
          %v1277 = vsel %vm1274, %v1276, %v1272
          %v1278 = vmul.f32 1.0, %v1277
          %v1279 = vrcp.pop %v1263
          %v1280 = vmul.f32 %v1263, %v1279
          %v1281 = vsub.f32 1.0, %v1280
          %v1282 = vmul.f32 %v1279, %v1281
          %v1283 = vadd.f32 %v1279, %v1282
          %vm1284 = vweird.f32 %v1263
          %vm1285 = vweird.f32 %v1279
          %vm1286 = vmor %vm1284, %vm1285
          %v1287 = vsel %vm1286, %v1279, %v1283
          %v1288 = vand.u32 2147483647, %v1263
          %vm1289 = vcmp.eq.f32.partialorder %v1288, 8.507059e+37
          %v1290 = vand.u32 %v1263, 2147483648
          %v1291 = vor.u32 1.1754944e-38, %v1290
          %v1292 = vsel %vm1289, %v1291, %v1287
          %v1293 = vmul.f32 1.0, %v1292
          %v1294 = vtanh.pop %v1212
          %v1295 = vtanh.pop %v1216
          %v1296 = vxor.u32 %v1213, 2147483648
          %v1297 = vxor.u32 %v1217, 2147483648
          %v1298 = vmul.f32 %v1296, 1.442695
          %v1299 = vpow.pop %v1298
          %v1300 = vmul.f32 %v1297, 1.442695
          %v1301 = vpow.pop %v1300
          %v1302 = vadd.f32 %v1299, 1.0
          %v1303 = vadd.f32 %v1301, 1.0
          %v1304 = vrcp.pop %v1302
          %v1305 = vmul.f32 %v1302, %v1304
          %v1306 = vsub.f32 1.0, %v1305
          %v1307 = vmul.f32 %v1304, %v1306
          %v1308 = vadd.f32 %v1304, %v1307
          %vm1309 = vweird.f32 %v1302
          %vm1310 = vweird.f32 %v1304
          %vm1311 = vmor %vm1309, %vm1310
          %v1312 = vsel %vm1311, %v1304, %v1308
          %v1313 = vand.u32 2147483647, %v1302
          %vm1314 = vcmp.eq.f32.partialorder %v1313, 8.507059e+37
          %v1315 = vand.u32 %v1302, 2147483648
          %v1316 = vor.u32 1.1754944e-38, %v1315
          %v1317 = vsel %vm1314, %v1316, %v1312
          %v1318 = vmul.f32 1.0, %v1317
          %v1319 = vrcp.pop %v1303
          %v1320 = vmul.f32 %v1303, %v1319
          %v1321 = vsub.f32 1.0, %v1320
          %v1322 = vmul.f32 %v1319, %v1321
          %v1323 = vadd.f32 %v1319, %v1322
          %vm1324 = vweird.f32 %v1303
          %vm1325 = vweird.f32 %v1319
          %vm1326 = vmor %vm1324, %vm1325
          %v1327 = vsel %vm1326, %v1319, %v1323
          %v1328 = vand.u32 2147483647, %v1303
          %vm1329 = vcmp.eq.f32.partialorder %v1328, 8.507059e+37
          %v1330 = vand.u32 %v1303, 2147483648
          %v1331 = vor.u32 1.1754944e-38, %v1330
          %v1332 = vsel %vm1329, %v1331, %v1327
          %v1333 = vmul.f32 1.0, %v1332
          %v1334 = vld [vmem:[#allocation3] sm:$0xff]
          %v1335 = vld [vmem:[#allocation3 + $0x8] sm:$0xff]
          %v1336 = vmul.f32 %v1278, %v1334
          %v1337 = vmul.f32 %v1293, %v1335
          %v1338 = vmul.f32 %v1240, %v1294
          %v1339 = vmul.f32 %v1255, %v1295
          %v1340 = vadd.f32 %v1336, %v1338
          %v1341 = vadd.f32 %v1337, %v1339
          %v1342 = vtanh.pop %v1340
          %v1343 = vtanh.pop %v1341
          %v1344 = vmul.f32 %v1318, %v1342
          %v1345 = vmul.f32 %v1333, %v1343
          %1346 = vst [vmem:[#allocation2] sm:$0xff] %v1344
          %1347 = vst [vmem:[#allocation2 + $0x8] sm:$0xff] %v1345
          %1348 = vst [vmem:[#allocation3] sm:$0xff] %v1340
          %1349 = vst [vmem:[#allocation3 + $0x8] sm:$0xff] %v1341
          %v1350 = vpack.c.bf16 %v1345, %v1344
          %v1351 = vld [vmem:[#allocation16] sm:$0xf]
          %v1352 = vld [vmem:[#allocation16 + $0x4] sm:$0xf]
          %v1353 = vld [vmem:[#allocation16 + $0x8] sm:$0xf]
          %v1354 = vld [vmem:[#allocation16 + $0xc] sm:$0xf]
          %v1355 = vld [vmem:[#allocation16 + $0x10] sm:$0xf]
          %v1356 = vld [vmem:[#allocation16 + $0x14] sm:$0xf]
          %v1357 = vld [vmem:[#allocation16 + $0x18] sm:$0xf]
          %v1358 = vld [vmem:[#allocation16 + $0x1c] sm:$0xf]
          %v1359 = vld [vmem:[#allocation16 + $0x20] sm:$0xf]
          %v1360 = vld [vmem:[#allocation16 + $0x24] sm:$0xf]
          %v1361 = vld [vmem:[#allocation16 + $0x28] sm:$0xf]
          %v1362 = vld [vmem:[#allocation16 + $0x2c] sm:$0xf]
          %v1363 = vld [vmem:[#allocation16 + $0x30] sm:$0xf]
          %v1364 = vld [vmem:[#allocation16 + $0x34] sm:$0xf]
          %v1365 = vld [vmem:[#allocation16 + $0x38] sm:$0xf]
          %v1366 = vld [vmem:[#allocation16 + $0x3c] sm:$0xf]
          %v1367 = vld [vmem:[%s10] sm:$0x1]
          %v1369 = vperm.slane %v1367, 0
          %v1387 = vunpack.c.l.b16 %v1351
          %v1388 = vunpack.c.l.b16 %v1352
          %v1389 = vunpack.c.l.b16 %v1353
          %v1390 = vunpack.c.l.b16 %v1354
          %v1391 = vunpack.c.l.b16 %v1355
          %v1392 = vunpack.c.l.b16 %v1356
          %v1393 = vunpack.c.l.b16 %v1357
          %v1394 = vunpack.c.l.b16 %v1358
          %v1395 = vunpack.c.l.b16 %v1359
          %v1396 = vunpack.c.l.b16 %v1360
          %v1397 = vunpack.c.l.b16 %v1361
          %v1398 = vunpack.c.l.b16 %v1362
          %v1399 = vunpack.c.l.b16 %v1363
          %v1400 = vunpack.c.l.b16 %v1364
          %v1401 = vunpack.c.l.b16 %v1365
          %v1402 = vunpack.c.l.b16 %v1366
          %v1403 = vpack.c.b16 %v1388, %v1387
          %v1404 = vpack.c.b16 %v1390, %v1389
          %v1405 = vpack.c.b16 %v1392, %v1391
          %v1406 = vpack.c.b16 %v1394, %v1393
          %v1407 = vpack.c.b16 %v1396, %v1395
          %v1408 = vpack.c.b16 %v1398, %v1397
          %v1409 = vpack.c.b16 %v1400, %v1399
          %v1410 = vpack.c.b16 %v1402, %v1401
          %1419 = vmatpush.bf16.msra.mxu0 %v1410
          %1420 = vmatpush.bf16.msra.mxu0 %v1409
          %1421 = vmatpush.bf16.msra.mxu0 %v1408
          %1422 = vmatpush.bf16.msra.mxu0 %v1407
          %1423 = vmatpush.bf16.msra.mxu0 %v1406
          %1424 = vmatpush.bf16.msra.mxu0 %v1405
          %1425 = vmatpush.bf16.msra.mxu0 %v1404
          %1426 = vmatpush.bf16.msra.mxu0 %v1403
          %1427 = vmatmul.bf16.gmra.mxu0 %v1350
          %v1428 = vpop.f32.mrf.mxu0
          %v1429 = vadd.f32 %v1369, %v1428
          %v1430 = vpop.f32.mrf.mxu0
          %v1431 = vadd.f32 %v1369, %v1430
          %1432 = vdwg.mxu0
          %1433 = vst [vmem:[%s461] sm:$0xff] %v1429
          %1434 = vst [vmem:[%s461 + $0x8] sm:$0xff] %v1431
          %p1435 = scmp.lt.s32.totalorder %s29, 7
          %s1436 = sld [smem:[#allocation6 + %s29]]
          %p1437 = scmp.gt.s32.totalorder %s1436, 0
          %p1438 = pnand %p1435, %p1437
          %p1439 = pneg %p1438
          // Predicated region
          $region97: #{tpu_custom_call.1} parent=95 // pred_check
            _
          $region98: #{tpu_custom_call.1} parent=95 // pred_check_branch
            %1441 = sbr.rel (%p1438) target = $region100
          $region99: #{tpu_custom_call.1} parent=95 // pred_region
            %s1442 = smul.u32 %s29, 16
            %s1443 = scalar_lea.vmem %s0, %s1442
            %v1444 = vld [vmem:[%s1443] sm:$0xff]
            %v1445 = vld [vmem:[%s1443 + $0x8] sm:$0xff]
            %vm1446 = vcmask 7168
            %1447 = vst.msk [vmem:[#allocation5] sm:$0xff] %vm1446, %v1444
            %1448 = vst.msk [vmem:[#allocation5 + $0x8] sm:$0xff] %vm1446, %v1445
          $region100: #{tpu_custom_call.1} parent=95 // pred_fallthru
            _
          %p1449 = scmp.le.s32.totalorder %s1436, 0
          %p1450 = pnand %p1435, %p1449
          %p1451 = pneg %p1450
          // Predicated region
          $region101: #{tpu_custom_call.1} parent=95 // pred_check
            _
          $region102: #{tpu_custom_call.1} parent=95 // pred_check_branch
            %1453 = sbr.rel (%p1450) target = $region104
          $region103: #{tpu_custom_call.1} parent=95 // pred_region
            %v1454 = vlaneseq
            %v1455 = vand.u32 %v1454, 127
            %1456 = vmax.xlane.f32.xlu0 %v1429
            %v1457 = vpop.xlane.xlu0 %1456
            %1458 = vmax.xlane.f32.xlu0 %v1431
            %v1459 = vpop.xlane.xlu0 %1458
            %vm1460 = vcmp.eq.f32.partialorder %v1429, %v1457
            %vm1461 = vcmp.eq.f32.partialorder %v1431, %v1459
            %v1462 = vsel %vm1460, %v1455, 128
            %v1463 = vsel %vm1461, %v1455, 128
            %v1464 = vand.u32 %v1462, 65535
            %v1465 = vshra.s32 %v1462, 16
            %v1466 = vcvt.s32.f32 %v1464
            %v1467 = vcvt.s32.f32 %v1465
            %1468 = vmin.xlane.f32.xlu0 %v1467
            %v1469 = vpop.xlane.xlu0 %1468
            %vm1470 = vcmp.eq.f32.partialorder %v1467, %v1469
            %v1471 = vsel %vm1470, %v1466, inf
            %1472 = vmin.xlane.f32.xlu0 %v1471
            %v1473 = vpop.xlane.xlu0 %1472
            %v1474 = vcvt.f32.s32 %v1473
            %v1475 = vcvt.f32.s32 %v1469
            %v1476 = vshll.u32 %v1475, 16
            %v1477 = vadd.s32 %v1476, %v1474
            %v1478 = vand.u32 %v1463, 65535
            %v1479 = vshra.s32 %v1463, 16
            %v1480 = vcvt.s32.f32 %v1478
            %v1481 = vcvt.s32.f32 %v1479
            %1482 = vmin.xlane.f32.xlu0 %v1481
            %v1483 = vpop.xlane.xlu0 %1482
            %vm1484 = vcmp.eq.f32.partialorder %v1481, %v1483
            %v1485 = vsel %vm1484, %v1480, inf
            %1486 = vmin.xlane.f32.xlu0 %v1485
            %v1487 = vpop.xlane.xlu0 %1486
            %v1488 = vcvt.f32.s32 %v1487
            %v1489 = vcvt.f32.s32 %v1483
            %v1490 = vshll.u32 %v1489, 16
            %v1491 = vadd.s32 %v1490, %v1488
            %vm1492 = vcmask 7168
            %1493 = vst.msk [vmem:[#allocation5] sm:$0xff] %vm1492, %v1477
            %1494 = vst.msk [vmem:[#allocation5 + $0x8] sm:$0xff] %vm1492, %v1491
          $region104: #{tpu_custom_call.1} parent=95 // pred_fallthru
            _
        $region96: #{tpu_custom_call.1} parent=63 // pred_fallthru
          _
        %s1495 = sand.u32 %s268, 1
        %s1496 = scalar_lea.sflag [#allocation8], %s1495
        %s1497 = sand.u32 %s268, 1
        %s1498 = smul.addr %s1497, 16
        %s1499 = scalar_lea.vmem [#allocation17], %s1498
        // Predicated region
        $region105: #{tpu_custom_call.1} parent=63 // pred_check
          %p1500 = pneg %p278
        $region106: #{tpu_custom_call.1} parent=63 // pred_check_branch
          %1502 = sbr.rel (%p1500) target = $region108
        $region107: #{tpu_custom_call.1} parent=63 // pred_region
          %1504 = vsyncadd %s1496, 0
          %s1505 = smul.addr %s29, 2
          %s1506 = smul.addr %s1505, 8
          %s1507 = scalar_lea.hbm %s11, %s1506
          %s1508 = sshll.u32 %s1499, 4
          %s1509 = int_to_ptr.vmem [resolvable:$true] %s1508
          %s1510 = sshll.u32 %s1507, 4
          %s1511 = int_to_ptr.hbm [resolvable:$true] %s1510
          %1516 = dma.vmem_to_hbm [thread:$0]  %s1509, 256, %s1511, %s1496, 128, 128, 8
        $region108: #{tpu_custom_call.1} parent=63 // pred_fallthru
          _
      $region64: #{tpu_custom_call.1} parent=5 // pred_fallthru
        _
      %p1517 = scmp.le.s32.totalorder 2, %s24
      // Predicated region
      $region109: #{tpu_custom_call.1} parent=5 // pred_check
        %p1518 = pneg %p1517
      $region110: #{tpu_custom_call.1} parent=5 // pred_check_branch
        %1520 = sbr.rel (%p1518) target = $region112
      $region111: #{tpu_custom_call.1} parent=5 // pred_region
        %s1521 = ssub.s32 %s24, 2
        // Predicated region
        $region113: #{tpu_custom_call.1} parent=111 // pred_check
          %p1522 = pneg %p284
        $region114: #{tpu_custom_call.1} parent=111 // pred_check_branch
          %1524 = sbr.rel (%p1522) target = $region116
        $region115: #{tpu_custom_call.1} parent=111 // pred_region
          %s1525 = sand.u32 %s269, 1
          %s1526 = scalar_lea.sflag [#allocation8], %s1525
          %s1527 = sand.u32 %s269, 1
          %s1528 = smul.addr %s1527, 16
          %s1529 = scalar_lea.vmem [#allocation17], %s1528
          %1531 = dma.done %s1526, 256
        $region116: #{tpu_custom_call.1} parent=111 // pred_fallthru
          _
      $region112: #{tpu_custom_call.1} parent=5 // pred_fallthru
        _
    $region6: #{tpu_custom_call.1} parent=1 // loop_footer
      %s28 = sadd.s32 1, %s24
    $region7: #{tpu_custom_call.1} parent=1 // loop_footer_branch
      %23 = sbr.rel target = $region3
    $region8: #{tpu_custom_call.1} parent=1 // loop_exit
      _
    %1532 = vsyncpa [#allocation7], 1
    %s1533 = scalar_lea.sflag [#allocation7], 1
    %1534 = vsyncpa %s1533, 1
    %1535 = vsyncpa [#allocation12], 1
    %1536 = vsyncpa [#allocation15], 1
    %1537 = vsyncpa [#allocation8], 1
    %s1538 = scalar_lea.sflag [#allocation8], 1
    %1539 = vsyncpa %s1538, 1
    %1540 = vsyncpa [#allocation9], 1
    %s1541 = scalar_lea.sflag [#allocation9], 1
    %1542 = vsyncpa %s1541, 1

</llo_original>
